<compile_context>
chip_gen: v7x
topology: tpu7x:2x2x1
jax: 0.10.0
libtpu: 0.0.40
codegen_flags: <defaults>
</compile_context>

<pallas_src>
import jax
import jax.numpy as jnp
import numpy as np
from jax.experimental import pallas as pl
from jax.experimental.pallas import tpu as pltpu

LN_EPS = 1e-12
NEG_INF = jnp.float32(-1e30)


def _make_kernel(n_head: int, head_dim: int, d_model: int,
                 seq_len: int, seq_pad: int):
    D, dh, H = d_model, head_dim, n_head
    q_scale = dh ** -0.5

    def kernel(x_ref, ln1_w, ln1_b, wqkv, bqkv, wo, bo, ln2_w, ln2_b,
               wfc, bfc, wpr, bpr, o_ref,
               q_sc, k_sc, v_sc, attn_sc):
        x = x_ref[...].astype(jnp.float32)                        # (Lp, D)

        def layer_norm(v, w_ref, b_ref):
            u = jnp.mean(v, axis=-1, keepdims=True)
            s = jnp.mean((v - u) ** 2, axis=-1, keepdims=True)
            vhat = (v - u) * jax.lax.rsqrt(s + LN_EPS)            # EUP rsqrt
            return w_ref[...] * vhat + b_ref[...]                 # (1,D) bcast

        # ---------------- attention branch ----------------
        h = layer_norm(x, ln1_w, ln1_b).astype(jnp.bfloat16)      # (Lp, D)
        # Fused QKV projection: one big MXU matmul, f32 accumulation.
        qkv = jnp.dot(h, wqkv[...], preferred_element_type=jnp.float32)
        qkv = qkv + bqkv[...]                                     # (Lp, 3D) f32

        # Split heads into (H, Lp, dh) VMEM scratches (static slices).
        for hi in range(H):
            q_sc[hi] = (qkv[:, hi * dh:(hi + 1) * dh] * q_scale).astype(jnp.bfloat16)
            k_sc[hi] = qkv[:, D + hi * dh:D + (hi + 1) * dh].astype(jnp.bfloat16)
            v_sc[hi] = qkv[:, 2 * D + hi * dh:2 * D + (hi + 1) * dh].astype(jnp.bfloat16)

        # Head-batched score matmul + softmax (f32).
        sc = jnp.einsum('hqd,hkd->hqk', q_sc[...], k_sc[...],
                        preferred_element_type=jnp.float32)       # (H, Lp, Lp)
        if seq_pad != seq_len:                                    # mask padded keys
            key_pos = jax.lax.broadcasted_iota(jnp.int32, (seq_pad, seq_pad), 1)
            sc = jnp.where((key_pos < seq_len)[None], sc, NEG_INF)
        sc = sc - jnp.max(sc, axis=-1, keepdims=True)
        p = jnp.exp(sc)
        p = p * pl.reciprocal(jnp.sum(p, axis=-1, keepdims=True), approx=True)

        oh = jnp.einsum('hqk,hkd->hqd', p.astype(jnp.bfloat16), v_sc[...],
                        preferred_element_type=jnp.float32)       # (H, Lp, dh)
        # Merge heads back into (Lp, D) via scratch stores (no lane concat).
        for hi in range(H):
            attn_sc[:, hi * dh:(hi + 1) * dh] = oh[hi].astype(jnp.bfloat16)

        attn = jnp.dot(attn_sc[...], wo[...],
                       preferred_element_type=jnp.float32) + bo[...]
        x = x + attn                                              # residual 1

        # ---------------- MLP branch ----------------
        h2 = layer_norm(x, ln2_w, ln2_b).astype(jnp.bfloat16)
        hid = jnp.dot(h2, wfc[...], preferred_element_type=jnp.float32) + bfc[...]
        hid = hid * jax.nn.sigmoid(1.702 * hid)                   # QuickGELU (EUP)
        x = x + jnp.dot(hid.astype(jnp.bfloat16), wpr[...],
                        preferred_element_type=jnp.float32) + bpr[...]

        o_ref[...] = x.astype(o_ref.dtype)

    return kernel


def prepare_params(params, compute_dtype=jnp.bfloat16):
    """One-time weight prep (transposes / fusion / casts) outside the hot path."""
    D = params["ln1_w"].shape[0]
    D_mlp = params["fc_b"].shape[0]
    f32 = jnp.float32
    wq = params["in_proj_w"][:D].T
    wk = params["in_proj_w"][D:2 * D].T
    wv = params["in_proj_w"][2 * D:].T
    return dict(
        ln1_w=params["ln1_w"].reshape(1, D).astype(f32),
        ln1_b=params["ln1_b"].reshape(1, D).astype(f32),
        wqkv=jnp.concatenate([wq, wk, wv], axis=1).astype(compute_dtype),  # (D, 3D)
        bqkv=params["in_proj_b"].reshape(1, 3 * D).astype(f32),
        wo=params["out_w"].T.astype(compute_dtype),
        bo=params["out_b"].reshape(1, D).astype(f32),
        ln2_w=params["ln2_w"].reshape(1, D).astype(f32),
        ln2_b=params["ln2_b"].reshape(1, D).astype(f32),
        wfc=params["fc_w"].T.astype(compute_dtype),               # (D, D_mlp)
        bfc=params["fc_b"].reshape(1, D_mlp).astype(f32),
        wpr=params["proj_w"].T.astype(compute_dtype),             # (D_mlp, D)
        bpr=params["proj_b"].reshape(1, D).astype(f32),
    )


def residual_attention_block(x, prepped, n_head):
    """x: (L, N, D) float32. Returns (L, N, D)."""
    L, N, D = x.shape
    dh = D // n_head
    D_mlp = prepped["wfc"].shape[1]
    Lp = ((L + 7) // 8) * 8                                       # pad seq to sublanes

    xb = jnp.transpose(x, (1, 0, 2))                              # (N, L, D)
    if Lp != L:
        xb = jnp.pad(xb, ((0, 0), (0, Lp - L), (0, 0)))

    def rep(shape):
        # Replicated (untiled) weight: full block, index 0 for every grid step.
        return pl.BlockSpec(shape, lambda n: (0,) * len(shape))

    kernel = _make_kernel(n_head, dh, D, L, Lp)

    out = pl.pallas_call(
        kernel,
        out_shape=jax.ShapeDtypeStruct((N, Lp, D), x.dtype),
        grid_spec=pltpu.PrefetchScalarGridSpec(
            num_scalar_prefetch=0,
            grid=(N,),   # NOTE(v7x): N >= 2 keeps both TensorCores busy.
            in_specs=[
                pl.BlockSpec((None, Lp, D), lambda n: (n, 0, 0)),  # x (batch squeezed)
                rep((1, D)), rep((1, D)),                          # ln1 w,b
                rep((D, 3 * D)), rep((1, 3 * D)),                  # fused QKV w,b
                rep((D, D)), rep((1, D)),                          # wo, bo
                rep((1, D)), rep((1, D)),                          # ln2 w,b
                rep((D, D_mlp)), rep((1, D_mlp)),                  # wfc, bfc
                rep((D_mlp, D)), rep((1, D)),                      # wpr, bpr
            ],
            out_specs=pl.BlockSpec((None, Lp, D), lambda n: (n, 0, 0)),
            scratch_shapes=[
                pltpu.VMEM((n_head, Lp, dh), jnp.bfloat16),        # q heads
                pltpu.VMEM((n_head, Lp, dh), jnp.bfloat16),        # k heads
                pltpu.VMEM((n_head, Lp, dh), jnp.bfloat16),        # v heads
                pltpu.VMEM((Lp, D), jnp.bfloat16),                 # merged attn
            ],
        ),
        compiler_params=pltpu.CompilerParams(
            dimension_semantics=("parallel",),
            vmem_limit_bytes=48 * 1024 * 1024,
        ),
    )(xb, prepped["ln1_w"], prepped["ln1_b"], prepped["wqkv"], prepped["bqkv"],
      prepped["wo"], prepped["bo"], prepped["ln2_w"], prepped["ln2_b"],
      prepped["wfc"], prepped["bfc"], prepped["wpr"], prepped["bpr"])

    if Lp != L:
        out = out[:, :L]
    return jnp.transpose(out, (1, 0, 2))                          # back to (L, N, D)


def reference_block(x, params, n_head):
    """Pure-JAX f32 reference mirroring the PyTorch module (for verification)."""
    L, N, D = x.shape
    dh = D // n_head

    def ln(v, w, b):
        v = v.astype(jnp.float32)
        u = v.mean(-1, keepdims=True)
        s = ((v - u) ** 2).mean(-1, keepdims=True)
        return w * ((v - u) / jnp.sqrt(s + LN_EPS)) + b

    h = ln(x, params["ln1_w"], params["ln1_b"])
    qkv = h @ params["in_proj_w"].T + params["in_proj_b"]
    q, k, v = jnp.split(qkv, 3, axis=-1)
    q = q * (dh ** -0.5)

    def split_heads(t):
        return t.reshape(L, N, n_head, dh).transpose(1, 2, 0, 3)  # (N,H,L,dh)

    qh, kh, vh = split_heads(q), split_heads(k), split_heads(v)
    sc = jnp.einsum("nhld,nhmd->nhlm", qh, kh)
    p = jax.nn.softmax(sc, axis=-1)
    oh = jnp.einsum("nhlm,nhmd->nhld", p, vh)
    o = oh.transpose(2, 0, 1, 3).reshape(L, N, D)
    x = x + (o @ params["out_w"].T + params["out_b"])

    h2 = ln(x, params["ln2_w"], params["ln2_b"])
    hid = h2 @ params["fc_w"].T + params["fc_b"]
    hid = hid * jax.nn.sigmoid(1.702 * hid)
    return x + (hid @ params["proj_w"].T + params["proj_b"])


if __name__ == "__main__":
    # Small deterministic config: seq L=16, batch N=2, d_model=128, heads=4, mlp 4x.
    L, N, D, n_head = 16, 2, 128, 4
    D_mlp = int(D * 4.0)

    key = jax.random.PRNGKey(0)
    ks = jax.random.split(key, 10)
    scale = 0.02

    params = {
        "ln1_w": jnp.ones((D,), jnp.float32),
        "ln1_b": jnp.zeros((D,), jnp.float32),
        "in_proj_w": scale * jax.random.normal(ks[0], (3 * D, D), jnp.float32),
        "in_proj_b": scale * jax.random.normal(ks[1], (3 * D,), jnp.float32),
        "out_w": scale * jax.random.normal(ks[2], (D, D), jnp.float32),
        "out_b": scale * jax.random.normal(ks[3], (D,), jnp.float32),
        "ln2_w": jnp.ones((D,), jnp.float32),
        "ln2_b": jnp.zeros((D,), jnp.float32),
        "fc_w": scale * jax.random.normal(ks[4], (D_mlp, D), jnp.float32),
        "fc_b": scale * jax.random.normal(ks[5], (D_mlp,), jnp.float32),
        "proj_w": scale * jax.random.normal(ks[6], (D, D_mlp), jnp.float32),
        "proj_b": scale * jax.random.normal(ks[7], (D,), jnp.float32),
    }

    x = jax.random.normal(ks[8], (L, N, D), jnp.float32)

    prepped = prepare_params(params)                              # one-time weight prep

    # TODO(synk): attn_mask is None in this config; masked attention not exercised.
    out = residual_attention_block(x, prepped, n_head)
    out = jax.block_until_ready(out)

    ref = reference_block(x, params, n_head)
    # bf16 matmul inputs with f32 accumulation -> loosened tolerance.
    np.testing.assert_allclose(np.asarray(out), np.asarray(ref),
                               rtol=2e-2, atol=2e-2)
    print("KERNEL_OK")
</pallas_src>

<mosaic_0001>
module attributes {stable_mosaic.version = 11 : i64} {
  func.func @kernel(%arg0: i32, %arg1: memref<1x16x128xf32, #tpu.memory_space<vmem>>, %arg2: memref<1x128xf32, #tpu.memory_space<vmem>>, %arg3: memref<1x128xf32, #tpu.memory_space<vmem>>, %arg4: memref<128x384xbf16, #tpu.memory_space<vmem>>, %arg5: memref<1x384xf32, #tpu.memory_space<vmem>>, %arg6: memref<128x128xbf16, #tpu.memory_space<vmem>>, %arg7: memref<1x128xf32, #tpu.memory_space<vmem>>, %arg8: memref<1x128xf32, #tpu.memory_space<vmem>>, %arg9: memref<1x128xf32, #tpu.memory_space<vmem>>, %arg10: memref<128x512xbf16, #tpu.memory_space<vmem>>, %arg11: memref<1x512xf32, #tpu.memory_space<vmem>>, %arg12: memref<512x128xbf16, #tpu.memory_space<vmem>>, %arg13: memref<1x128xf32, #tpu.memory_space<vmem>>, %arg14: memref<1x16x128xf32, #tpu.memory_space<vmem>>, %arg15: memref<4x16x32xbf16, #tpu.memory_space<vmem>>, %arg16: memref<4x16x32xbf16, #tpu.memory_space<vmem>>, %arg17: memref<4x16x32xbf16, #tpu.memory_space<vmem>>, %arg18: memref<16x128xbf16, #tpu.memory_space<vmem>>) attributes {dimension_semantics = [#tpu.dimension_semantics<parallel>], iteration_bounds = array<i64: 2>, scalar_prefetch = 0 : i64, scratch_operands = 4 : i64, tpu.core_type = #tpu.core_type<tc>, window_params = [{transform_indices = @transform_0, window_bounds = array<i64: 1, 16, 128>}, {pipeline_mode = #tpu.pipeline_mode<synchronous>, transform_indices = @transform_1, window_bounds = array<i64: 1, 128>}, {pipeline_mode = #tpu.pipeline_mode<synchronous>, transform_indices = @transform_2, window_bounds = array<i64: 1, 128>}, {pipeline_mode = #tpu.pipeline_mode<synchronous>, transform_indices = @transform_3, window_bounds = array<i64: 128, 384>}, {pipeline_mode = #tpu.pipeline_mode<synchronous>, transform_indices = @transform_4, window_bounds = array<i64: 1, 384>}, {pipeline_mode = #tpu.pipeline_mode<synchronous>, transform_indices = @transform_5, window_bounds = array<i64: 128, 128>}, {pipeline_mode = #tpu.pipeline_mode<synchronous>, transform_indices = @transform_6, window_bounds = array<i64: 1, 128>}, {pipeline_mode = #tpu.pipeline_mode<synchronous>, transform_indices = @transform_7, window_bounds = array<i64: 1, 128>}, {pipeline_mode = #tpu.pipeline_mode<synchronous>, transform_indices = @transform_8, window_bounds = array<i64: 1, 128>}, {pipeline_mode = #tpu.pipeline_mode<synchronous>, transform_indices = @transform_9, window_bounds = array<i64: 128, 512>}, {pipeline_mode = #tpu.pipeline_mode<synchronous>, transform_indices = @transform_10, window_bounds = array<i64: 1, 512>}, {pipeline_mode = #tpu.pipeline_mode<synchronous>, transform_indices = @transform_11, window_bounds = array<i64: 512, 128>}, {pipeline_mode = #tpu.pipeline_mode<synchronous>, transform_indices = @transform_12, window_bounds = array<i64: 1, 128>}, {transform_indices = @transform_13, window_bounds = array<i64: 1, 16, 128>}]} {
    %c0 = arith.constant 0 : index
    %c0_0 = arith.constant 0 : index
    %c0_1 = arith.constant 0 : index
    %0 = vector.load %arg1[%c0, %c0_0, %c0_1] : memref<1x16x128xf32, #tpu.memory_space<vmem>>, vector<1x16x128xf32>
    %1 = vector.shape_cast %0 : vector<1x16x128xf32> to vector<16x128xf32>
    %cst = arith.constant dense<0.000000e+00> : vector<16xf32>
    %2 = vector.multi_reduction <add>, %1, %cst [1] : vector<16x128xf32> to vector<16xf32>
    %3 = vector.shape_cast %2 : vector<16xf32> to vector<16x1xf32>
    %cst_2 = arith.constant 1.280000e+02 : f32
    %4 = vector.broadcast %cst_2 : f32 to vector<16x1xf32>
    %5 = arith.divf %3, %4 : vector<16x1xf32>
    %6 = vector.broadcast %5 : vector<16x1xf32> to vector<16x128xf32>
    %7 = arith.subf %1, %6 : vector<16x128xf32>
    %8 = arith.mulf %7, %7 : vector<16x128xf32>
    %cst_3 = arith.constant dense<0.000000e+00> : vector<16xf32>
    %9 = vector.multi_reduction <add>, %8, %cst_3 [1] : vector<16x128xf32> to vector<16xf32>
    %10 = vector.shape_cast %9 : vector<16xf32> to vector<16x1xf32>
    %cst_4 = arith.constant 1.280000e+02 : f32
    %11 = vector.broadcast %cst_4 : f32 to vector<16x1xf32>
    %12 = arith.divf %10, %11 : vector<16x1xf32>
    %13 = vector.broadcast %5 : vector<16x1xf32> to vector<16x128xf32>
    %14 = arith.subf %1, %13 : vector<16x128xf32>
    %cst_5 = arith.constant 9.99999996E-13 : f32
    %15 = vector.broadcast %cst_5 : f32 to vector<16x1xf32>
    %16 = arith.addf %12, %15 : vector<16x1xf32>
    %17 = math.rsqrt %16 : vector<16x1xf32>
    %18 = vector.broadcast %17 : vector<16x1xf32> to vector<16x128xf32>
    %19 = arith.mulf %14, %18 : vector<16x128xf32>
    %c0_6 = arith.constant 0 : index
    %c0_7 = arith.constant 0 : index
    %20 = vector.load %arg2[%c0_6, %c0_7] : memref<1x128xf32, #tpu.memory_space<vmem>>, vector<1x128xf32>
    %21 = vector.broadcast %20 : vector<1x128xf32> to vector<16x128xf32>
    %22 = arith.mulf %21, %19 : vector<16x128xf32>
    %c0_8 = arith.constant 0 : index
    %c0_9 = arith.constant 0 : index
    %23 = vector.load %arg3[%c0_8, %c0_9] : memref<1x128xf32, #tpu.memory_space<vmem>>, vector<1x128xf32>
    %24 = vector.broadcast %23 : vector<1x128xf32> to vector<16x128xf32>
    %25 = arith.addf %22, %24 : vector<16x128xf32>
    %26 = arith.truncf %25 : vector<16x128xf32> to vector<16x128xbf16>
    %c0_10 = arith.constant 0 : index
    %c0_11 = arith.constant 0 : index
    %27 = vector.load %arg4[%c0_10, %c0_11] : memref<128x384xbf16, #tpu.memory_space<vmem>>, vector<128x384xbf16>
    %cst_12 = arith.constant dense<0.000000e+00> : vector<16x384xf32>
    %28 = tpu.matmul %26, %27, %cst_12 {dimension_numbers = #tpu.dot_dimension_numbers<[1], [0], [0], [1], [0, 0, 1, 1], [], []>} : vector<16x128xbf16>, vector<128x384xbf16>, vector<16x384xf32> -> vector<16x384xf32>
    %c0_13 = arith.constant 0 : index
    %c0_14 = arith.constant 0 : index
    %29 = vector.load %arg5[%c0_13, %c0_14] : memref<1x384xf32, #tpu.memory_space<vmem>>, vector<1x384xf32>
    %30 = vector.broadcast %29 : vector<1x384xf32> to vector<16x384xf32>
    %31 = arith.addf %28, %30 : vector<16x384xf32>
    %32 = vector.extract_strided_slice %31 {offsets = [0, 0], sizes = [16, 32], strides = [1, 1]} : vector<16x384xf32> to vector<16x32xf32>
    %cst_15 = arith.constant 0.176776692 : f32
    %33 = vector.broadcast %cst_15 : f32 to vector<16x32xf32>
    %34 = arith.mulf %32, %33 : vector<16x32xf32>
    %35 = arith.truncf %34 : vector<16x32xf32> to vector<16x32xbf16>
    %c0_16 = arith.constant 0 : index
    %c0_17 = arith.constant 0 : index
    %c0_18 = arith.constant 0 : index
    %36 = vector.load %arg15[%c0_16, %c0_17, %c0_18] : memref<4x16x32xbf16, #tpu.memory_space<vmem>>, vector<1x16x32xbf16>
    %37 = vector.shape_cast %36 : vector<1x16x32xbf16> to vector<16x32xbf16>
    %38 = vector.shape_cast %35 : vector<16x32xbf16> to vector<1x16x32xbf16>
    tpu.vector_store %arg15[%c0_16, %c0_17, %c0_18], %38 {strides = array<i32>} : memref<4x16x32xbf16, #tpu.memory_space<vmem>>, vector<1x16x32xbf16>,
    %39 = vector.extract_strided_slice %31 {offsets = [0, 128], sizes = [16, 32], strides = [1, 1]} : vector<16x384xf32> to vector<16x32xf32>
    %40 = arith.truncf %39 : vector<16x32xf32> to vector<16x32xbf16>
    %c0_19 = arith.constant 0 : index
    %c0_20 = arith.constant 0 : index
    %c0_21 = arith.constant 0 : index
    %41 = vector.load %arg16[%c0_19, %c0_20, %c0_21] : memref<4x16x32xbf16, #tpu.memory_space<vmem>>, vector<1x16x32xbf16>
    %42 = vector.shape_cast %41 : vector<1x16x32xbf16> to vector<16x32xbf16>
    %43 = vector.shape_cast %40 : vector<16x32xbf16> to vector<1x16x32xbf16>
    tpu.vector_store %arg16[%c0_19, %c0_20, %c0_21], %43 {strides = array<i32>} : memref<4x16x32xbf16, #tpu.memory_space<vmem>>, vector<1x16x32xbf16>,
    %44 = vector.extract_strided_slice %31 {offsets = [0, 256], sizes = [16, 32], strides = [1, 1]} : vector<16x384xf32> to vector<16x32xf32>
    %45 = arith.truncf %44 : vector<16x32xf32> to vector<16x32xbf16>
    %c0_22 = arith.constant 0 : index
    %c0_23 = arith.constant 0 : index
    %c0_24 = arith.constant 0 : index
    %46 = vector.load %arg17[%c0_22, %c0_23, %c0_24] : memref<4x16x32xbf16, #tpu.memory_space<vmem>>, vector<1x16x32xbf16>
    %47 = vector.shape_cast %46 : vector<1x16x32xbf16> to vector<16x32xbf16>
    %48 = vector.shape_cast %45 : vector<16x32xbf16> to vector<1x16x32xbf16>
    tpu.vector_store %arg17[%c0_22, %c0_23, %c0_24], %48 {strides = array<i32>} : memref<4x16x32xbf16, #tpu.memory_space<vmem>>, vector<1x16x32xbf16>,
    %49 = vector.extract_strided_slice %31 {offsets = [0, 32], sizes = [16, 32], strides = [1, 1]} : vector<16x384xf32> to vector<16x32xf32>
    %cst_25 = arith.constant 0.176776692 : f32
    %50 = vector.broadcast %cst_25 : f32 to vector<16x32xf32>
    %51 = arith.mulf %49, %50 : vector<16x32xf32>
    %52 = arith.truncf %51 : vector<16x32xf32> to vector<16x32xbf16>
    %c1 = arith.constant 1 : index
    %c0_26 = arith.constant 0 : index
    %c0_27 = arith.constant 0 : index
    %53 = vector.load %arg15[%c1, %c0_26, %c0_27] : memref<4x16x32xbf16, #tpu.memory_space<vmem>>, vector<1x16x32xbf16>
    %54 = vector.shape_cast %53 : vector<1x16x32xbf16> to vector<16x32xbf16>
    %55 = vector.shape_cast %52 : vector<16x32xbf16> to vector<1x16x32xbf16>
    tpu.vector_store %arg15[%c1, %c0_26, %c0_27], %55 {strides = array<i32>} : memref<4x16x32xbf16, #tpu.memory_space<vmem>>, vector<1x16x32xbf16>,
    %56 = vector.extract_strided_slice %31 {offsets = [0, 160], sizes = [16, 32], strides = [1, 1]} : vector<16x384xf32> to vector<16x32xf32>
    %57 = arith.truncf %56 : vector<16x32xf32> to vector<16x32xbf16>
    %c1_28 = arith.constant 1 : index
    %c0_29 = arith.constant 0 : index
    %c0_30 = arith.constant 0 : index
    %58 = vector.load %arg16[%c1_28, %c0_29, %c0_30] : memref<4x16x32xbf16, #tpu.memory_space<vmem>>, vector<1x16x32xbf16>
    %59 = vector.shape_cast %58 : vector<1x16x32xbf16> to vector<16x32xbf16>
    %60 = vector.shape_cast %57 : vector<16x32xbf16> to vector<1x16x32xbf16>
    tpu.vector_store %arg16[%c1_28, %c0_29, %c0_30], %60 {strides = array<i32>} : memref<4x16x32xbf16, #tpu.memory_space<vmem>>, vector<1x16x32xbf16>,
    %61 = vector.extract_strided_slice %31 {offsets = [0, 288], sizes = [16, 32], strides = [1, 1]} : vector<16x384xf32> to vector<16x32xf32>
    %62 = arith.truncf %61 : vector<16x32xf32> to vector<16x32xbf16>
    %c1_31 = arith.constant 1 : index
    %c0_32 = arith.constant 0 : index
    %c0_33 = arith.constant 0 : index
    %63 = vector.load %arg17[%c1_31, %c0_32, %c0_33] : memref<4x16x32xbf16, #tpu.memory_space<vmem>>, vector<1x16x32xbf16>
    %64 = vector.shape_cast %63 : vector<1x16x32xbf16> to vector<16x32xbf16>
    %65 = vector.shape_cast %62 : vector<16x32xbf16> to vector<1x16x32xbf16>
    tpu.vector_store %arg17[%c1_31, %c0_32, %c0_33], %65 {strides = array<i32>} : memref<4x16x32xbf16, #tpu.memory_space<vmem>>, vector<1x16x32xbf16>,
    %66 = vector.extract_strided_slice %31 {offsets = [0, 64], sizes = [16, 32], strides = [1, 1]} : vector<16x384xf32> to vector<16x32xf32>
    %cst_34 = arith.constant 0.176776692 : f32
    %67 = vector.broadcast %cst_34 : f32 to vector<16x32xf32>
    %68 = arith.mulf %66, %67 : vector<16x32xf32>
    %69 = arith.truncf %68 : vector<16x32xf32> to vector<16x32xbf16>
    %c2 = arith.constant 2 : index
    %c0_35 = arith.constant 0 : index
    %c0_36 = arith.constant 0 : index
    %70 = vector.load %arg15[%c2, %c0_35, %c0_36] : memref<4x16x32xbf16, #tpu.memory_space<vmem>>, vector<1x16x32xbf16>
    %71 = vector.shape_cast %70 : vector<1x16x32xbf16> to vector<16x32xbf16>
    %72 = vector.shape_cast %69 : vector<16x32xbf16> to vector<1x16x32xbf16>
    tpu.vector_store %arg15[%c2, %c0_35, %c0_36], %72 {strides = array<i32>} : memref<4x16x32xbf16, #tpu.memory_space<vmem>>, vector<1x16x32xbf16>,
    %73 = vector.extract_strided_slice %31 {offsets = [0, 192], sizes = [16, 32], strides = [1, 1]} : vector<16x384xf32> to vector<16x32xf32>
    %74 = arith.truncf %73 : vector<16x32xf32> to vector<16x32xbf16>
    %c2_37 = arith.constant 2 : index
    %c0_38 = arith.constant 0 : index
    %c0_39 = arith.constant 0 : index
    %75 = vector.load %arg16[%c2_37, %c0_38, %c0_39] : memref<4x16x32xbf16, #tpu.memory_space<vmem>>, vector<1x16x32xbf16>
    %76 = vector.shape_cast %75 : vector<1x16x32xbf16> to vector<16x32xbf16>
    %77 = vector.shape_cast %74 : vector<16x32xbf16> to vector<1x16x32xbf16>
    tpu.vector_store %arg16[%c2_37, %c0_38, %c0_39], %77 {strides = array<i32>} : memref<4x16x32xbf16, #tpu.memory_space<vmem>>, vector<1x16x32xbf16>,
    %78 = vector.extract_strided_slice %31 {offsets = [0, 320], sizes = [16, 32], strides = [1, 1]} : vector<16x384xf32> to vector<16x32xf32>
    %79 = arith.truncf %78 : vector<16x32xf32> to vector<16x32xbf16>
    %c2_40 = arith.constant 2 : index
    %c0_41 = arith.constant 0 : index
    %c0_42 = arith.constant 0 : index
    %80 = vector.load %arg17[%c2_40, %c0_41, %c0_42] : memref<4x16x32xbf16, #tpu.memory_space<vmem>>, vector<1x16x32xbf16>
    %81 = vector.shape_cast %80 : vector<1x16x32xbf16> to vector<16x32xbf16>
    %82 = vector.shape_cast %79 : vector<16x32xbf16> to vector<1x16x32xbf16>
    tpu.vector_store %arg17[%c2_40, %c0_41, %c0_42], %82 {strides = array<i32>} : memref<4x16x32xbf16, #tpu.memory_space<vmem>>, vector<1x16x32xbf16>,
    %83 = vector.extract_strided_slice %31 {offsets = [0, 96], sizes = [16, 32], strides = [1, 1]} : vector<16x384xf32> to vector<16x32xf32>
    %cst_43 = arith.constant 0.176776692 : f32
    %84 = vector.broadcast %cst_43 : f32 to vector<16x32xf32>
    %85 = arith.mulf %83, %84 : vector<16x32xf32>
    %86 = arith.truncf %85 : vector<16x32xf32> to vector<16x32xbf16>
    %c3 = arith.constant 3 : index
    %c0_44 = arith.constant 0 : index
    %c0_45 = arith.constant 0 : index
    %87 = vector.load %arg15[%c3, %c0_44, %c0_45] : memref<4x16x32xbf16, #tpu.memory_space<vmem>>, vector<1x16x32xbf16>
    %88 = vector.shape_cast %87 : vector<1x16x32xbf16> to vector<16x32xbf16>
    %89 = vector.shape_cast %86 : vector<16x32xbf16> to vector<1x16x32xbf16>
    tpu.vector_store %arg15[%c3, %c0_44, %c0_45], %89 {strides = array<i32>} : memref<4x16x32xbf16, #tpu.memory_space<vmem>>, vector<1x16x32xbf16>,
    %90 = vector.extract_strided_slice %31 {offsets = [0, 224], sizes = [16, 32], strides = [1, 1]} : vector<16x384xf32> to vector<16x32xf32>
    %91 = arith.truncf %90 : vector<16x32xf32> to vector<16x32xbf16>
    %c3_46 = arith.constant 3 : index
    %c0_47 = arith.constant 0 : index
    %c0_48 = arith.constant 0 : index
    %92 = vector.load %arg16[%c3_46, %c0_47, %c0_48] : memref<4x16x32xbf16, #tpu.memory_space<vmem>>, vector<1x16x32xbf16>
    %93 = vector.shape_cast %92 : vector<1x16x32xbf16> to vector<16x32xbf16>
    %94 = vector.shape_cast %91 : vector<16x32xbf16> to vector<1x16x32xbf16>
    tpu.vector_store %arg16[%c3_46, %c0_47, %c0_48], %94 {strides = array<i32>} : memref<4x16x32xbf16, #tpu.memory_space<vmem>>, vector<1x16x32xbf16>,
    %95 = vector.extract_strided_slice %31 {offsets = [0, 352], sizes = [16, 32], strides = [1, 1]} : vector<16x384xf32> to vector<16x32xf32>
    %96 = arith.truncf %95 : vector<16x32xf32> to vector<16x32xbf16>
    %c3_49 = arith.constant 3 : index
    %c0_50 = arith.constant 0 : index
    %c0_51 = arith.constant 0 : index
    %97 = vector.load %arg17[%c3_49, %c0_50, %c0_51] : memref<4x16x32xbf16, #tpu.memory_space<vmem>>, vector<1x16x32xbf16>
    %98 = vector.shape_cast %97 : vector<1x16x32xbf16> to vector<16x32xbf16>
    %99 = vector.shape_cast %96 : vector<16x32xbf16> to vector<1x16x32xbf16>
    tpu.vector_store %arg17[%c3_49, %c0_50, %c0_51], %99 {strides = array<i32>} : memref<4x16x32xbf16, #tpu.memory_space<vmem>>, vector<1x16x32xbf16>,
    %c0_52 = arith.constant 0 : index
    %c0_53 = arith.constant 0 : index
    %c0_54 = arith.constant 0 : index
    %100 = vector.load %arg15[%c0_52, %c0_53, %c0_54] : memref<4x16x32xbf16, #tpu.memory_space<vmem>>, vector<4x16x32xbf16>
    %c0_55 = arith.constant 0 : index
    %c0_56 = arith.constant 0 : index
    %c0_57 = arith.constant 0 : index
    %101 = vector.load %arg16[%c0_55, %c0_56, %c0_57] : memref<4x16x32xbf16, #tpu.memory_space<vmem>>, vector<4x16x32xbf16>
    "tpu.trace_start"() <{level = 10 : i32, message = "hqd,hkd->hqk"}> : () -> ()
    %cst_58 = arith.constant dense<0.000000e+00> : vector<4x16x16xf32>
    %102 = tpu.matmul %100, %101, %cst_58 {dimension_numbers = #tpu.dot_dimension_numbers<[2], [2], [1], [1], [0, 0, 0, 1, 1, 1], [0], [0]>} : vector<4x16x32xbf16>, vector<4x16x32xbf16>, vector<4x16x16xf32> -> vector<4x16x16xf32>
    "tpu.trace_stop"() : () -> ()
    %cst_59 = arith.constant dense<0xFF800000> : vector<4x16xf32>
    %103 = vector.multi_reduction <maximumf>, %102, %cst_59 [2] : vector<4x16x16xf32> to vector<4x16xf32>
    %104 = vector.shape_cast %103 : vector<4x16xf32> to vector<4x16x1xf32>
    %105 = vector.broadcast %104 : vector<4x16x1xf32> to vector<4x16x16xf32>
    %106 = arith.subf %102, %105 : vector<4x16x16xf32>
    %107 = math.exp %106 : vector<4x16x16xf32>
    %cst_60 = arith.constant dense<0.000000e+00> : vector<4x16xf32>
    %108 = vector.multi_reduction <add>, %107, %cst_60 [2] : vector<4x16x16xf32> to vector<4x16xf32>
    %109 = vector.shape_cast %108 : vector<4x16xf32> to vector<4x16x1xf32>
    %110 = tpu.reciprocal %109 {approx = true} : vector<4x16x1xf32> -> vector<4x16x1xf32>
    %111 = vector.broadcast %110 : vector<4x16x1xf32> to vector<4x16x16xf32>
    %112 = arith.mulf %107, %111 : vector<4x16x16xf32>
    %113 = arith.truncf %112 : vector<4x16x16xf32> to vector<4x16x16xbf16>
    %c0_61 = arith.constant 0 : index
    %c0_62 = arith.constant 0 : index
    %c0_63 = arith.constant 0 : index
    %114 = vector.load %arg17[%c0_61, %c0_62, %c0_63] : memref<4x16x32xbf16, #tpu.memory_space<vmem>>, vector<4x16x32xbf16>
    "tpu.trace_start"() <{level = 10 : i32, message = "hqk,hkd->hqd"}> : () -> ()
    %cst_64 = arith.constant dense<0.000000e+00> : vector<4x16x32xf32>
    %115 = tpu.matmul %113, %114, %cst_64 {dimension_numbers = #tpu.dot_dimension_numbers<[2], [1], [1], [2], [0, 0, 0, 1, 1, 2], [0], [0]>} : vector<4x16x16xbf16>, vector<4x16x32xbf16>, vector<4x16x32xf32> -> vector<4x16x32xf32>
    "tpu.trace_stop"() : () -> ()
    %116 = vector.extract_strided_slice %115 {offsets = [0, 0, 0], sizes = [1, 16, 32], strides = [1, 1, 1]} : vector<4x16x32xf32> to vector<1x16x32xf32>
    %117 = vector.shape_cast %116 : vector<1x16x32xf32> to vector<16x32xf32>
    %118 = arith.truncf %117 : vector<16x32xf32> to vector<16x32xbf16>
    %c0_65 = arith.constant 0 : index
    %c0_66 = arith.constant 0 : index
    %119 = vector.load %arg18[%c0_65, %c0_66] : memref<16x128xbf16, #tpu.memory_space<vmem>>, vector<16x32xbf16>
    tpu.vector_store %arg18[%c0_65, %c0_66], %118 {strides = array<i32>} : memref<16x128xbf16, #tpu.memory_space<vmem>>, vector<16x32xbf16>,
    %120 = vector.extract_strided_slice %115 {offsets = [1, 0, 0], sizes = [1, 16, 32], strides = [1, 1, 1]} : vector<4x16x32xf32> to vector<1x16x32xf32>
    %121 = vector.shape_cast %120 : vector<1x16x32xf32> to vector<16x32xf32>
    %122 = arith.truncf %121 : vector<16x32xf32> to vector<16x32xbf16>
    %c0_67 = arith.constant 0 : index
    %c32 = arith.constant 32 : index
    %123 = vector.load %arg18[%c0_67, %c32] : memref<16x128xbf16, #tpu.memory_space<vmem>>, vector<16x32xbf16>
    tpu.vector_store %arg18[%c0_67, %c32], %122 {strides = array<i32>} : memref<16x128xbf16, #tpu.memory_space<vmem>>, vector<16x32xbf16>,
    %124 = vector.extract_strided_slice %115 {offsets = [2, 0, 0], sizes = [1, 16, 32], strides = [1, 1, 1]} : vector<4x16x32xf32> to vector<1x16x32xf32>
    %125 = vector.shape_cast %124 : vector<1x16x32xf32> to vector<16x32xf32>
    %126 = arith.truncf %125 : vector<16x32xf32> to vector<16x32xbf16>
    %c0_68 = arith.constant 0 : index
    %c64 = arith.constant 64 : index
    %127 = vector.load %arg18[%c0_68, %c64] : memref<16x128xbf16, #tpu.memory_space<vmem>>, vector<16x32xbf16>
    tpu.vector_store %arg18[%c0_68, %c64], %126 {strides = array<i32>} : memref<16x128xbf16, #tpu.memory_space<vmem>>, vector<16x32xbf16>,
    %128 = vector.extract_strided_slice %115 {offsets = [3, 0, 0], sizes = [1, 16, 32], strides = [1, 1, 1]} : vector<4x16x32xf32> to vector<1x16x32xf32>
    %129 = vector.shape_cast %128 : vector<1x16x32xf32> to vector<16x32xf32>
    %130 = arith.truncf %129 : vector<16x32xf32> to vector<16x32xbf16>
    %c0_69 = arith.constant 0 : index
    %c96 = arith.constant 96 : index
    %131 = vector.load %arg18[%c0_69, %c96] : memref<16x128xbf16, #tpu.memory_space<vmem>>, vector<16x32xbf16>
    tpu.vector_store %arg18[%c0_69, %c96], %130 {strides = array<i32>} : memref<16x128xbf16, #tpu.memory_space<vmem>>, vector<16x32xbf16>,
    %c0_70 = arith.constant 0 : index
    %c0_71 = arith.constant 0 : index
    %132 = vector.load %arg18[%c0_70, %c0_71] : memref<16x128xbf16, #tpu.memory_space<vmem>>, vector<16x128xbf16>
    %c0_72 = arith.constant 0 : index
    %c0_73 = arith.constant 0 : index
    %133 = vector.load %arg6[%c0_72, %c0_73] : memref<128x128xbf16, #tpu.memory_space<vmem>>, vector<128x128xbf16>
    %cst_74 = arith.constant dense<0.000000e+00> : vector<16x128xf32>
    %134 = tpu.matmul %132, %133, %cst_74 {dimension_numbers = #tpu.dot_dimension_numbers<[1], [0], [0], [1], [0, 0, 1, 1], [], []>} : vector<16x128xbf16>, vector<128x128xbf16>, vector<16x128xf32> -> vector<16x128xf32>
    %c0_75 = arith.constant 0 : index
    %c0_76 = arith.constant 0 : index
    %135 = vector.load %arg7[%c0_75, %c0_76] : memref<1x128xf32, #tpu.memory_space<vmem>>, vector<1x128xf32>
    %136 = vector.broadcast %135 : vector<1x128xf32> to vector<16x128xf32>
    %137 = arith.addf %134, %136 : vector<16x128xf32>
    %138 = arith.addf %1, %137 : vector<16x128xf32>
    %cst_77 = arith.constant dense<0.000000e+00> : vector<16xf32>
    %139 = vector.multi_reduction <add>, %138, %cst_77 [1] : vector<16x128xf32> to vector<16xf32>
    %140 = vector.shape_cast %139 : vector<16xf32> to vector<16x1xf32>
    %cst_78 = arith.constant 1.280000e+02 : f32
    %141 = vector.broadcast %cst_78 : f32 to vector<16x1xf32>
    %142 = arith.divf %140, %141 : vector<16x1xf32>
    %143 = vector.broadcast %142 : vector<16x1xf32> to vector<16x128xf32>
    %144 = arith.subf %138, %143 : vector<16x128xf32>
    %145 = arith.mulf %144, %144 : vector<16x128xf32>
    %cst_79 = arith.constant dense<0.000000e+00> : vector<16xf32>
    %146 = vector.multi_reduction <add>, %145, %cst_79 [1] : vector<16x128xf32> to vector<16xf32>
    %147 = vector.shape_cast %146 : vector<16xf32> to vector<16x1xf32>
    %cst_80 = arith.constant 1.280000e+02 : f32
    %148 = vector.broadcast %cst_80 : f32 to vector<16x1xf32>
    %149 = arith.divf %147, %148 : vector<16x1xf32>
    %150 = vector.broadcast %142 : vector<16x1xf32> to vector<16x128xf32>
    %151 = arith.subf %138, %150 : vector<16x128xf32>
    %cst_81 = arith.constant 9.99999996E-13 : f32
    %152 = vector.broadcast %cst_81 : f32 to vector<16x1xf32>
    %153 = arith.addf %149, %152 : vector<16x1xf32>
    %154 = math.rsqrt %153 : vector<16x1xf32>
    %155 = vector.broadcast %154 : vector<16x1xf32> to vector<16x128xf32>
    %156 = arith.mulf %151, %155 : vector<16x128xf32>
    %c0_82 = arith.constant 0 : index
    %c0_83 = arith.constant 0 : index
    %157 = vector.load %arg8[%c0_82, %c0_83] : memref<1x128xf32, #tpu.memory_space<vmem>>, vector<1x128xf32>
    %158 = vector.broadcast %157 : vector<1x128xf32> to vector<16x128xf32>
    %159 = arith.mulf %158, %156 : vector<16x128xf32>
    %c0_84 = arith.constant 0 : index
    %c0_85 = arith.constant 0 : index
    %160 = vector.load %arg9[%c0_84, %c0_85] : memref<1x128xf32, #tpu.memory_space<vmem>>, vector<1x128xf32>
    %161 = vector.broadcast %160 : vector<1x128xf32> to vector<16x128xf32>
    %162 = arith.addf %159, %161 : vector<16x128xf32>
    %163 = arith.truncf %162 : vector<16x128xf32> to vector<16x128xbf16>
    %c0_86 = arith.constant 0 : index
    %c0_87 = arith.constant 0 : index
    %164 = vector.load %arg10[%c0_86, %c0_87] : memref<128x512xbf16, #tpu.memory_space<vmem>>, vector<128x512xbf16>
    %cst_88 = arith.constant dense<0.000000e+00> : vector<16x512xf32>
    %165 = tpu.matmul %163, %164, %cst_88 {dimension_numbers = #tpu.dot_dimension_numbers<[1], [0], [0], [1], [0, 0, 1, 1], [], []>} : vector<16x128xbf16>, vector<128x512xbf16>, vector<16x512xf32> -> vector<16x512xf32>
    %c0_89 = arith.constant 0 : index
    %c0_90 = arith.constant 0 : index
    %166 = vector.load %arg11[%c0_89, %c0_90] : memref<1x512xf32, #tpu.memory_space<vmem>>, vector<1x512xf32>
    %167 = vector.broadcast %166 : vector<1x512xf32> to vector<16x512xf32>
    %168 = arith.addf %165, %167 : vector<16x512xf32>
    %cst_91 = arith.constant 1.702000e+00 : f32
    %169 = vector.broadcast %cst_91 : f32 to vector<16x512xf32>
    %170 = arith.mulf %169, %168 : vector<16x512xf32>
    %171 = arith.negf %170 : vector<16x512xf32>
    %172 = math.exp %171 : vector<16x512xf32>
    %cst_92 = arith.constant 1.000000e+00 : f32
    %173 = vector.broadcast %cst_92 : f32 to vector<16x512xf32>
    %174 = arith.addf %173, %172 : vector<16x512xf32>
    %175 = arith.divf %173, %174 : vector<16x512xf32>
    %176 = arith.mulf %168, %175 : vector<16x512xf32>
    %177 = arith.truncf %176 : vector<16x512xf32> to vector<16x512xbf16>
    %c0_93 = arith.constant 0 : index
    %c0_94 = arith.constant 0 : index
    %178 = vector.load %arg12[%c0_93, %c0_94] : memref<512x128xbf16, #tpu.memory_space<vmem>>, vector<512x128xbf16>
    %cst_95 = arith.constant dense<0.000000e+00> : vector<16x128xf32>
    %179 = tpu.matmul %177, %178, %cst_95 {dimension_numbers = #tpu.dot_dimension_numbers<[1], [0], [0], [1], [0, 0, 1, 1], [], []>} : vector<16x512xbf16>, vector<512x128xbf16>, vector<16x128xf32> -> vector<16x128xf32>
    %180 = arith.addf %138, %179 : vector<16x128xf32>
    %c0_96 = arith.constant 0 : index
    %c0_97 = arith.constant 0 : index
    %181 = vector.load %arg13[%c0_96, %c0_97] : memref<1x128xf32, #tpu.memory_space<vmem>>, vector<1x128xf32>
    %182 = vector.broadcast %181 : vector<1x128xf32> to vector<16x128xf32>
    %183 = arith.addf %180, %182 : vector<16x128xf32>
    %c0_98 = arith.constant 0 : index
    %c0_99 = arith.constant 0 : index
    %c0_100 = arith.constant 0 : index
    %184 = vector.load %arg14[%c0_98, %c0_99, %c0_100] : memref<1x16x128xf32, #tpu.memory_space<vmem>>, vector<1x16x128xf32>
    %185 = vector.shape_cast %184 : vector<1x16x128xf32> to vector<16x128xf32>
    %186 = vector.shape_cast %183 : vector<16x128xf32> to vector<1x16x128xf32>
    tpu.vector_store %arg14[%c0_98, %c0_99, %c0_100], %186 {strides = array<i32>} : memref<1x16x128xf32, #tpu.memory_space<vmem>>, vector<1x16x128xf32>,
    return
  }
  func.func @transform_0(%arg0: i32) -> (i32, i32, i32) {
    %c0_i32 = arith.constant 0 : i32
    %c0_i32_0 = arith.constant 0 : i32
    %c0_i32_1 = arith.constant 0 : i32
    return %arg0, %c0_i32, %c0_i32_0 : i32, i32, i32
  }
  func.func @transform_1(%arg0: i32) -> (i32, i32) {
    %c0_i32 = arith.constant 0 : i32
    %c0_i32_0 = arith.constant 0 : i32
    %c0_i32_1 = arith.constant 0 : i32
    return %c0_i32, %c0_i32_0 : i32, i32
  }
  func.func @transform_2(%arg0: i32) -> (i32, i32) {
    %c0_i32 = arith.constant 0 : i32
    %c0_i32_0 = arith.constant 0 : i32
    %c0_i32_1 = arith.constant 0 : i32
    return %c0_i32, %c0_i32_0 : i32, i32
  }
  func.func @transform_3(%arg0: i32) -> (i32, i32) {
    %c0_i32 = arith.constant 0 : i32
    %c0_i32_0 = arith.constant 0 : i32
    %c0_i32_1 = arith.constant 0 : i32
    return %c0_i32, %c0_i32_0 : i32, i32
  }
  func.func @transform_4(%arg0: i32) -> (i32, i32) {
    %c0_i32 = arith.constant 0 : i32
    %c0_i32_0 = arith.constant 0 : i32
    %c0_i32_1 = arith.constant 0 : i32
    return %c0_i32, %c0_i32_0 : i32, i32
  }
  func.func @transform_5(%arg0: i32) -> (i32, i32) {
    %c0_i32 = arith.constant 0 : i32
    %c0_i32_0 = arith.constant 0 : i32
    %c0_i32_1 = arith.constant 0 : i32
    return %c0_i32, %c0_i32_0 : i32, i32
  }
  func.func @transform_6(%arg0: i32) -> (i32, i32) {
    %c0_i32 = arith.constant 0 : i32
    %c0_i32_0 = arith.constant 0 : i32
    %c0_i32_1 = arith.constant 0 : i32
    return %c0_i32, %c0_i32_0 : i32, i32
  }
  func.func @transform_7(%arg0: i32) -> (i32, i32) {
    %c0_i32 = arith.constant 0 : i32
    %c0_i32_0 = arith.constant 0 : i32
    %c0_i32_1 = arith.constant 0 : i32
    return %c0_i32, %c0_i32_0 : i32, i32
  }
  func.func @transform_8(%arg0: i32) -> (i32, i32) {
    %c0_i32 = arith.constant 0 : i32
    %c0_i32_0 = arith.constant 0 : i32
    %c0_i32_1 = arith.constant 0 : i32
    return %c0_i32, %c0_i32_0 : i32, i32
  }
  func.func @transform_9(%arg0: i32) -> (i32, i32) {
    %c0_i32 = arith.constant 0 : i32
    %c0_i32_0 = arith.constant 0 : i32
    %c0_i32_1 = arith.constant 0 : i32
    return %c0_i32, %c0_i32_0 : i32, i32
  }
  func.func @transform_10(%arg0: i32) -> (i32, i32) {
    %c0_i32 = arith.constant 0 : i32
    %c0_i32_0 = arith.constant 0 : i32
    %c0_i32_1 = arith.constant 0 : i32
    return %c0_i32, %c0_i32_0 : i32, i32
  }
  func.func @transform_11(%arg0: i32) -> (i32, i32) {
    %c0_i32 = arith.constant 0 : i32
    %c0_i32_0 = arith.constant 0 : i32
    %c0_i32_1 = arith.constant 0 : i32
    return %c0_i32, %c0_i32_0 : i32, i32
  }
  func.func @transform_12(%arg0: i32) -> (i32, i32) {
    %c0_i32 = arith.constant 0 : i32
    %c0_i32_0 = arith.constant 0 : i32
    %c0_i32_1 = arith.constant 0 : i32
    return %c0_i32, %c0_i32_0 : i32, i32
  }
  func.func @transform_13(%arg0: i32) -> (i32, i32, i32) {
    %c0_i32 = arith.constant 0 : i32
    %c0_i32_0 = arith.constant 0 : i32
    %c0_i32_1 = arith.constant 0 : i32
    return %arg0, %c0_i32, %c0_i32_0 : i32, i32, i32
  }
}

</mosaic_0001>

<llo_original>
// kernel: tpu_custom_call.1
$region0: #{tpu_custom_call.1}
  #allocation0 [shape = 'u32[]', space=smem, size = 0x4, offset = 0x4, fixed_abs, tag = 'smem constant byte address 0x4 - core index']
  #allocation1 [shape = 'u32[144,128]{1,0:T(1,128)}', space=vmem, size = 0x12000, scoped, tag = 'internal scratch']
  #allocation2 [shape = 'bf16[4,16,32]{2,1,0:T(16,128)(2,1)}', space=vmem, size = 0x4000, scoped, tag = 'scratch operand']
  #allocation3 [shape = 'bf16[4,16,32]{2,1,0:T(16,128)(2,1)}', space=vmem, size = 0x4000, scoped, tag = 'scratch operand']
  #allocation4 [shape = 'bf16[4,16,32]{2,1,0:T(16,128)(2,1)}', space=vmem, size = 0x4000, scoped, tag = 'scratch operand']
  #allocation5 [shape = 'bf16[16,128]{1,0:T(16,128)(2,1)}', space=vmem, size = 0x1000, scoped, tag = 'scratch operand']
  %s0 = inlined_call_operand.hbm [shape: f32[2,16,128], index: 0, kind: input, shape index: {}]
  %s1 = inlined_call_operand.hbm [shape: f32[1,128], index: 1, kind: input, shape index: {}]
  %s2 = inlined_call_operand.hbm [shape: f32[1,128], index: 2, kind: input, shape index: {}]
  %s3 = inlined_call_operand.hbm [shape: bf16[128,384], index: 3, kind: input, shape index: {}]
  %s4 = inlined_call_operand.vmem [shape: f32[1,384], index: 4, kind: input, shape index: {}]
  %s5 = inlined_call_operand.hbm [shape: bf16[128,128], index: 5, kind: input, shape index: {}]
  %s6 = inlined_call_operand.vmem [shape: f32[1,128], index: 6, kind: input, shape index: {}]
  %s7 = inlined_call_operand.vmem [shape: f32[1,128], index: 7, kind: input, shape index: {}]
  %s8 = inlined_call_operand.vmem [shape: f32[1,128], index: 8, kind: input, shape index: {}]
  %s9 = inlined_call_operand.hbm [shape: bf16[128,512], index: 9, kind: input, shape index: {}]
  %s10 = inlined_call_operand.vmem [shape: f32[1,512], index: 10, kind: input, shape index: {}]
  %s11 = inlined_call_operand.hbm [shape: bf16[512,128], index: 11, kind: input, shape index: {}]
  %s12 = inlined_call_operand.vmem [shape: f32[1,128], index: 12, kind: input, shape index: {}]
  %s13 = inlined_call_operand.hbm [shape: f32[2,16,128], index: 13, kind: output, shape index: {}]
  %s14 = sld [smem:[#allocation0]]
  $region113: #{tpu_custom_call.1} parent=0
    _
  %s16 = ssub.s32 1, %s14
  %s17 = scalar_select 0, %s16, %s14
  $region1: #{tpu_custom_call.1} parent=0
    #allocation6 [shape = 'u8[16384]{0}', space=vmem, size = 0x4000, scoped, tag = 'input window, operand 0']
    #allocation7 [shape = 's32[2]{0}', space=sflag, size = 0x8, scoped, tag = 'scoped memory for tpu_custom_call.1']
    #allocation8 [shape = 's32[2]{0}', space=sflag, size = 0x8, scoped, tag = 'scoped memory for tpu_custom_call.1']
    #allocation9 [shape = 'u8[512]{0}', space=vmem, size = 0x400, scoped, tag = 'input window, operand 1, single buffered']
    #allocation10 [shape = 's32[1]{0}', space=sflag, size = 0x4, scoped, tag = 'scoped memory for tpu_custom_call.1']
    #allocation11 [shape = 'u8[512]{0}', space=vmem, size = 0x400, scoped, tag = 'input window, operand 2, single buffered']
    #allocation12 [shape = 'u8[98304]{0}', space=vmem, size = 0x18000, scoped, tag = 'input window, operand 3, single buffered']
    #allocation13 [shape = 's32[1]{0}', space=sflag, size = 0x4, scoped, tag = 'scoped memory for tpu_custom_call.1']
    #allocation14 [shape = 'u8[32768]{0}', space=vmem, size = 0x8000, scoped, tag = 'input window, operand 5, single buffered']
    #allocation15 [shape = 'u8[131072]{0}', space=vmem, size = 0x20000, scoped, tag = 'input window, operand 9, single buffered']
    #allocation16 [shape = 's32[1]{0}', space=sflag, size = 0x4, scoped, tag = 'scoped memory for tpu_custom_call.1']
    #allocation17 [shape = 'u8[131072]{0}', space=vmem, size = 0x20000, scoped, tag = 'input window, operand 11, single buffered']
    #allocation18 [shape = 'u8[16384]{0}', space=vmem, size = 0x4000, scoped, tag = 'output window, operand 0']
    %18 = vsyncpa [#allocation7], 0
    %s19 = scalar_lea.sflag [#allocation7], 1
    %20 = vsyncpa %s19, 0
    %21 = vsyncpa [#allocation10], 0
    %22 = vsyncpa [#allocation13], 0
    %23 = vsyncpa [#allocation16], 0
    %24 = vsyncpa [#allocation8], 0
    %s25 = scalar_lea.sflag [#allocation8], 1
    %26 = vsyncpa %s25, 0
    loop: start=0, step=1, limit=4
    $region2: #{tpu_custom_call.1} parent=1 // loop_pre_header
      _
    $region3: #{tpu_custom_call.1} parent=1 // loop_header
      %s28 = sphi 0, %s32
      %p29 = scmp.ge.s32.totalorder %s28, 4
      %s38 = sphi 0, %s40
      %s41 = sphi 0, %s38
      %s42 = sphi 0, %s41
      %s58 = sphi 0, %s42
      %s62 = sphi 0, %s62
      %s64 = sphi 0, %s62
      %s65 = sphi 0, %s64
      %s79 = sphi 0, %s65
      %s83 = sphi 0, %s83
      %s85 = sphi 0, %s83
      %s86 = sphi 0, %s85
      %s100 = sphi 0, %s86
      %s104 = sphi 0, %s104
      %s106 = sphi 0, %s104
      %s107 = sphi 0, %s106
      %s121 = sphi 0, %s107
      %s125 = sphi 0, %s125
      %s127 = sphi 0, %s125
      %s128 = sphi 0, %s127
      %s142 = sphi 0, %s128
      %s146 = sphi 0, %s146
      %s148 = sphi 0, %s146
      %s149 = sphi 0, %s148
      %s163 = sphi 0, %s149
      %s167 = sphi 0, %s167
      %s169 = sphi 0, %s167
      %s170 = sphi 0, %s169
      %s184 = sphi 0, %s170
      %s188 = sphi 0, %s188
      %s190 = sphi 0, %s188
      %s191 = sphi 0, %s190
      %s205 = sphi 0, %s191
      %s209 = sphi 0, %s209
      %s211 = sphi 0, %s209
      %s212 = sphi 0, %s211
      %s226 = sphi 0, %s212
      %s230 = sphi 0, %s230
      %s232 = sphi 0, %s230
      %s233 = sphi 0, %s232
      %s247 = sphi 0, %s233
      %s251 = sphi 0, %s251
      %s253 = sphi 0, %s251
      %s254 = sphi 0, %s253
      %s268 = sphi 0, %s254
      %s272 = sphi 0, %s272
      %s274 = sphi 0, %s272
      %s275 = sphi 0, %s274
      %s289 = sphi 0, %s275
      %s293 = sphi 0, %s293
      %s295 = sphi 0, %s293
      %s296 = sphi 0, %s295
      %s310 = sphi 0, %s296
      %s316 = sphi 0, %s318
      %s319 = sphi 0, %s316
      %s320 = sphi 0, %s319
      %s336 = sphi 0, %s320
    $region4: #{tpu_custom_call.1} parent=1 // loop_header_branch
      %31 = sbr.rel (%p29) target = $region8
    $region5: #{tpu_custom_call.1} parent=1 // loop_body
      %s33 = ssub.s32 %s28, 1
      %s34 = ssub.s32 %s28, 2
      %s35 = sadd.s32 %s28, 1
      %s36 = ssub.s32 %s28, %s35
      %p37 = scmp.eq.s32.totalorder %s36, 0
      %s39 = sadd.s32 %s38, 1
      %s40 = scalar_select %p37, %s38, %s39
      %p43 = pneg %p37
      %p44 = scmp.eq.s32.totalorder %s28, 1
      %p45 = por %p43, %p44
      %p46 = scmp.ne.s32.totalorder %s38, %s41
      %p47 = scmp.eq.s32.totalorder %s28, 0
      %p48 = por %p46, %p47
      %p49 = scmp.ne.s32.totalorder %s38, %s41
      %p50 = scmp.eq.s32.totalorder %s33, 1
      %p51 = por %p49, %p50
      %p52 = scmp.ne.s32.totalorder %s41, %s42
      %p53 = scmp.eq.s32.totalorder %s33, 0
      %p54 = por %p52, %p53
      %p55 = scmp.ne.s32.totalorder %s41, %s42
      %p56 = scmp.eq.s32.totalorder %s34, 1
      %p57 = por %p55, %p56
      %p59 = scmp.ne.s32.totalorder %s42, %s58
      %p60 = scmp.eq.s32.totalorder %s34, 0
      %p61 = por %p59, %p60
      %s63 = sadd.s32 %s62, 1
      %p66 = scmp.eq.s32.totalorder %s28, 1
      %p67 = scmp.ne.s32.totalorder %s62, %s64
      %p68 = scmp.eq.s32.totalorder %s28, 0
      %p69 = por %p67, %p68
      %p70 = scmp.ne.s32.totalorder %s62, %s64
      %p71 = scmp.eq.s32.totalorder %s33, 1
      %p72 = por %p70, %p71
      %p73 = scmp.ne.s32.totalorder %s64, %s65
      %p74 = scmp.eq.s32.totalorder %s33, 0
      %p75 = por %p73, %p74
      %p76 = scmp.ne.s32.totalorder %s64, %s65
      %p77 = scmp.eq.s32.totalorder %s34, 1
      %p78 = por %p76, %p77
      %p80 = scmp.ne.s32.totalorder %s65, %s79
      %p81 = scmp.eq.s32.totalorder %s34, 0
      %p82 = por %p80, %p81
      %s84 = sadd.s32 %s83, 1
      %p87 = scmp.eq.s32.totalorder %s28, 1
      %p88 = scmp.ne.s32.totalorder %s83, %s85
      %p89 = scmp.eq.s32.totalorder %s28, 0
      %p90 = por %p88, %p89
      %p91 = scmp.ne.s32.totalorder %s83, %s85
      %p92 = scmp.eq.s32.totalorder %s33, 1
      %p93 = por %p91, %p92
      %p94 = scmp.ne.s32.totalorder %s85, %s86
      %p95 = scmp.eq.s32.totalorder %s33, 0
      %p96 = por %p94, %p95
      %p97 = scmp.ne.s32.totalorder %s85, %s86
      %p98 = scmp.eq.s32.totalorder %s34, 1
      %p99 = por %p97, %p98
      %p101 = scmp.ne.s32.totalorder %s86, %s100
      %p102 = scmp.eq.s32.totalorder %s34, 0
      %p103 = por %p101, %p102
      %s105 = sadd.s32 %s104, 1
      %p108 = scmp.eq.s32.totalorder %s28, 1
      %p109 = scmp.ne.s32.totalorder %s104, %s106
      %p110 = scmp.eq.s32.totalorder %s28, 0
      %p111 = por %p109, %p110
      %p112 = scmp.ne.s32.totalorder %s104, %s106
      %p113 = scmp.eq.s32.totalorder %s33, 1
      %p114 = por %p112, %p113
      %p115 = scmp.ne.s32.totalorder %s106, %s107
      %p116 = scmp.eq.s32.totalorder %s33, 0
      %p117 = por %p115, %p116
      %p118 = scmp.ne.s32.totalorder %s106, %s107
      %p119 = scmp.eq.s32.totalorder %s34, 1
      %p120 = por %p118, %p119
      %p122 = scmp.ne.s32.totalorder %s107, %s121
      %p123 = scmp.eq.s32.totalorder %s34, 0
      %p124 = por %p122, %p123
      %s126 = sadd.s32 %s125, 1
      %p129 = scmp.eq.s32.totalorder %s28, 1
      %p130 = scmp.ne.s32.totalorder %s125, %s127
      %p131 = scmp.eq.s32.totalorder %s28, 0
      %p132 = por %p130, %p131
      %p133 = scmp.ne.s32.totalorder %s125, %s127
      %p134 = scmp.eq.s32.totalorder %s33, 1
      %p135 = por %p133, %p134
      %p136 = scmp.ne.s32.totalorder %s127, %s128
      %p137 = scmp.eq.s32.totalorder %s33, 0
      %p138 = por %p136, %p137
      %p139 = scmp.ne.s32.totalorder %s127, %s128
      %p140 = scmp.eq.s32.totalorder %s34, 1
      %p141 = por %p139, %p140
      %p143 = scmp.ne.s32.totalorder %s128, %s142
      %p144 = scmp.eq.s32.totalorder %s34, 0
      %p145 = por %p143, %p144
      %s147 = sadd.s32 %s146, 1
      %p150 = scmp.eq.s32.totalorder %s28, 1
      %p151 = scmp.ne.s32.totalorder %s146, %s148
      %p152 = scmp.eq.s32.totalorder %s28, 0
      %p153 = por %p151, %p152
      %p154 = scmp.ne.s32.totalorder %s146, %s148
      %p155 = scmp.eq.s32.totalorder %s33, 1
      %p156 = por %p154, %p155
      %p157 = scmp.ne.s32.totalorder %s148, %s149
      %p158 = scmp.eq.s32.totalorder %s33, 0
      %p159 = por %p157, %p158
      %p160 = scmp.ne.s32.totalorder %s148, %s149
      %p161 = scmp.eq.s32.totalorder %s34, 1
      %p162 = por %p160, %p161
      %p164 = scmp.ne.s32.totalorder %s149, %s163
      %p165 = scmp.eq.s32.totalorder %s34, 0
      %p166 = por %p164, %p165
      %s168 = sadd.s32 %s167, 1
      %p171 = scmp.eq.s32.totalorder %s28, 1
      %p172 = scmp.ne.s32.totalorder %s167, %s169
      %p173 = scmp.eq.s32.totalorder %s28, 0
      %p174 = por %p172, %p173
      %p175 = scmp.ne.s32.totalorder %s167, %s169
      %p176 = scmp.eq.s32.totalorder %s33, 1
      %p177 = por %p175, %p176
      %p178 = scmp.ne.s32.totalorder %s169, %s170
      %p179 = scmp.eq.s32.totalorder %s33, 0
      %p180 = por %p178, %p179
      %p181 = scmp.ne.s32.totalorder %s169, %s170
      %p182 = scmp.eq.s32.totalorder %s34, 1
      %p183 = por %p181, %p182
      %p185 = scmp.ne.s32.totalorder %s170, %s184
      %p186 = scmp.eq.s32.totalorder %s34, 0
      %p187 = por %p185, %p186
      %s189 = sadd.s32 %s188, 1
      %p192 = scmp.eq.s32.totalorder %s28, 1
      %p193 = scmp.ne.s32.totalorder %s188, %s190
      %p194 = scmp.eq.s32.totalorder %s28, 0
      %p195 = por %p193, %p194
      %p196 = scmp.ne.s32.totalorder %s188, %s190
      %p197 = scmp.eq.s32.totalorder %s33, 1
      %p198 = por %p196, %p197
      %p199 = scmp.ne.s32.totalorder %s190, %s191
      %p200 = scmp.eq.s32.totalorder %s33, 0
      %p201 = por %p199, %p200
      %p202 = scmp.ne.s32.totalorder %s190, %s191
      %p203 = scmp.eq.s32.totalorder %s34, 1
      %p204 = por %p202, %p203
      %p206 = scmp.ne.s32.totalorder %s191, %s205
      %p207 = scmp.eq.s32.totalorder %s34, 0
      %p208 = por %p206, %p207
      %s210 = sadd.s32 %s209, 1
      %p213 = scmp.eq.s32.totalorder %s28, 1
      %p214 = scmp.ne.s32.totalorder %s209, %s211
      %p215 = scmp.eq.s32.totalorder %s28, 0
      %p216 = por %p214, %p215
      %p217 = scmp.ne.s32.totalorder %s209, %s211
      %p218 = scmp.eq.s32.totalorder %s33, 1
      %p219 = por %p217, %p218
      %p220 = scmp.ne.s32.totalorder %s211, %s212
      %p221 = scmp.eq.s32.totalorder %s33, 0
      %p222 = por %p220, %p221
      %p223 = scmp.ne.s32.totalorder %s211, %s212
      %p224 = scmp.eq.s32.totalorder %s34, 1
      %p225 = por %p223, %p224
      %p227 = scmp.ne.s32.totalorder %s212, %s226
      %p228 = scmp.eq.s32.totalorder %s34, 0
      %p229 = por %p227, %p228
      %s231 = sadd.s32 %s230, 1
      %p234 = scmp.eq.s32.totalorder %s28, 1
      %p235 = scmp.ne.s32.totalorder %s230, %s232
      %p236 = scmp.eq.s32.totalorder %s28, 0
      %p237 = por %p235, %p236
      %p238 = scmp.ne.s32.totalorder %s230, %s232
      %p239 = scmp.eq.s32.totalorder %s33, 1
      %p240 = por %p238, %p239
      %p241 = scmp.ne.s32.totalorder %s232, %s233
      %p242 = scmp.eq.s32.totalorder %s33, 0
      %p243 = por %p241, %p242
      %p244 = scmp.ne.s32.totalorder %s232, %s233
      %p245 = scmp.eq.s32.totalorder %s34, 1
      %p246 = por %p244, %p245
      %p248 = scmp.ne.s32.totalorder %s233, %s247
      %p249 = scmp.eq.s32.totalorder %s34, 0
      %p250 = por %p248, %p249
      %s252 = sadd.s32 %s251, 1
      %p255 = scmp.eq.s32.totalorder %s28, 1
      %p256 = scmp.ne.s32.totalorder %s251, %s253
      %p257 = scmp.eq.s32.totalorder %s28, 0
      %p258 = por %p256, %p257
      %p259 = scmp.ne.s32.totalorder %s251, %s253
      %p260 = scmp.eq.s32.totalorder %s33, 1
      %p261 = por %p259, %p260
      %p262 = scmp.ne.s32.totalorder %s253, %s254
      %p263 = scmp.eq.s32.totalorder %s33, 0
      %p264 = por %p262, %p263
      %p265 = scmp.ne.s32.totalorder %s253, %s254
      %p266 = scmp.eq.s32.totalorder %s34, 1
      %p267 = por %p265, %p266
      %p269 = scmp.ne.s32.totalorder %s254, %s268
      %p270 = scmp.eq.s32.totalorder %s34, 0
      %p271 = por %p269, %p270
      %s273 = sadd.s32 %s272, 1
      %p276 = scmp.eq.s32.totalorder %s28, 1
      %p277 = scmp.ne.s32.totalorder %s272, %s274
      %p278 = scmp.eq.s32.totalorder %s28, 0
      %p279 = por %p277, %p278
      %p280 = scmp.ne.s32.totalorder %s272, %s274
      %p281 = scmp.eq.s32.totalorder %s33, 1
      %p282 = por %p280, %p281
      %p283 = scmp.ne.s32.totalorder %s274, %s275
      %p284 = scmp.eq.s32.totalorder %s33, 0
      %p285 = por %p283, %p284
      %p286 = scmp.ne.s32.totalorder %s274, %s275
      %p287 = scmp.eq.s32.totalorder %s34, 1
      %p288 = por %p286, %p287
      %p290 = scmp.ne.s32.totalorder %s275, %s289
      %p291 = scmp.eq.s32.totalorder %s34, 0
      %p292 = por %p290, %p291
      %s294 = sadd.s32 %s293, 1
      %p297 = scmp.eq.s32.totalorder %s28, 1
      %p298 = scmp.ne.s32.totalorder %s293, %s295
      %p299 = scmp.eq.s32.totalorder %s28, 0
      %p300 = por %p298, %p299
      %p301 = scmp.ne.s32.totalorder %s293, %s295
      %p302 = scmp.eq.s32.totalorder %s33, 1
      %p303 = por %p301, %p302
      %p304 = scmp.ne.s32.totalorder %s295, %s296
      %p305 = scmp.eq.s32.totalorder %s33, 0
      %p306 = por %p304, %p305
      %p307 = scmp.ne.s32.totalorder %s295, %s296
      %p308 = scmp.eq.s32.totalorder %s34, 1
      %p309 = por %p307, %p308
      %p311 = scmp.ne.s32.totalorder %s296, %s310
      %p312 = scmp.eq.s32.totalorder %s34, 0
      %p313 = por %p311, %p312
      %s314 = ssub.s32 %s28, %s35
      %p315 = scmp.eq.s32.totalorder %s314, 0
      %s317 = sadd.s32 %s316, 1
      %s318 = scalar_select %p315, %s316, %s317
      %p321 = pneg %p315
      %p322 = scmp.eq.s32.totalorder %s28, 1
      %p323 = por %p321, %p322
      %p324 = scmp.ne.s32.totalorder %s316, %s319
      %p325 = scmp.eq.s32.totalorder %s28, 0
      %p326 = por %p324, %p325
      %p327 = scmp.ne.s32.totalorder %s316, %s319
      %p328 = scmp.eq.s32.totalorder %s33, 1
      %p329 = por %p327, %p328
      %p330 = scmp.ne.s32.totalorder %s319, %s320
      %p331 = scmp.eq.s32.totalorder %s33, 0
      %p332 = por %p330, %p331
      %p333 = scmp.ne.s32.totalorder %s319, %s320
      %p334 = scmp.eq.s32.totalorder %s34, 1
      %p335 = por %p333, %p334
      %p337 = scmp.ne.s32.totalorder %s320, %s336
      %p338 = scmp.eq.s32.totalorder %s34, 0
      %p339 = por %p337, %p338
      %p340 = scmp.le.s32.totalorder 1, %s28
      %p341 = scmp.lt.s32.totalorder %s28, 3
      %p342 = pnand %p340, %p341
      %p343 = pneg %p342
      // Predicated region
      $region9: #{tpu_custom_call.1} parent=5 // pred_check
        _
      $region10: #{tpu_custom_call.1} parent=5 // pred_check_branch
        %345 = sbr.rel (%p342) target = $region12
      $region11: #{tpu_custom_call.1} parent=5 // pred_region
        %s346 = ssub.s32 %s28, 1
        // Predicated region
        $region13: #{tpu_custom_call.1} parent=11 // pred_check
          %p347 = pneg %p75
        $region14: #{tpu_custom_call.1} parent=11 // pred_check_branch
          %349 = sbr.rel (%p347) target = $region16
        $region15: #{tpu_custom_call.1} parent=11 // pred_region
          %s351 = ssub.s32 16, 16
          %352 = vsyncadd [#allocation10], %s351
          %s354 = sshll.u32 [#allocation9], 4
          %s355 = int_to_ptr.vmem [resolvable:$true] %s354
          %357 = dma.hbm_to_vmem [thread:$0]  %s1, 16, %s355, [#allocation10]
        $region16: #{tpu_custom_call.1} parent=11 // pred_fallthru
          _
        // Predicated region
        $region17: #{tpu_custom_call.1} parent=11 // pred_check
          %p358 = pneg %p96
        $region18: #{tpu_custom_call.1} parent=11 // pred_check_branch
          %360 = sbr.rel (%p358) target = $region20
        $region19: #{tpu_custom_call.1} parent=11 // pred_region
          %s362 = ssub.s32 16, 16
          %363 = vsyncadd [#allocation10], %s362
          %s365 = sshll.u32 [#allocation11], 4
          %s366 = int_to_ptr.vmem [resolvable:$true] %s365
          %368 = dma.hbm_to_vmem [thread:$0]  %s2, 16, %s366, [#allocation10]
        $region20: #{tpu_custom_call.1} parent=11 // pred_fallthru
          _
        // Predicated region
        $region21: #{tpu_custom_call.1} parent=11 // pred_check
          %p369 = pneg %p117
        $region22: #{tpu_custom_call.1} parent=11 // pred_check_branch
          %371 = sbr.rel (%p369) target = $region24
        $region23: #{tpu_custom_call.1} parent=11 // pred_region
          %s373 = ssub.s32 3072, 3072
          %374 = vsyncadd [#allocation13], %s373
          %s375 = sshll.u32 [#allocation12], 4
          %s376 = int_to_ptr.vmem [resolvable:$true] %s375
          %381 = dma.hbm_to_vmem [thread:$0]  %s3, 3072, %s376, [#allocation13], 192, 192, 12
        $region24: #{tpu_custom_call.1} parent=11 // pred_fallthru
          _
        // Predicated region
        $region25: #{tpu_custom_call.1} parent=11 // pred_check
          %p382 = pneg %p138
        $region26: #{tpu_custom_call.1} parent=11 // pred_check_branch
          %384 = sbr.rel (%p382) target = $region28
        $region27: #{tpu_custom_call.1} parent=11 // pred_region
          _
        $region28: #{tpu_custom_call.1} parent=11 // pred_fallthru
          _
        // Predicated region
        $region29: #{tpu_custom_call.1} parent=11 // pred_check
          %p385 = pneg %p159
        $region30: #{tpu_custom_call.1} parent=11 // pred_check_branch
          %387 = sbr.rel (%p385) target = $region32
        $region31: #{tpu_custom_call.1} parent=11 // pred_region
          %s389 = ssub.s32 1024, 1024
          %390 = vsyncadd [#allocation13], %s389
          %s391 = sshll.u32 [#allocation14], 4
          %s392 = int_to_ptr.vmem [resolvable:$true] %s391
          %397 = dma.hbm_to_vmem [thread:$0]  %s5, 1024, %s392, [#allocation13], 64, 64, 4
        $region32: #{tpu_custom_call.1} parent=11 // pred_fallthru
          _
        // Predicated region
        $region33: #{tpu_custom_call.1} parent=11 // pred_check
          %p398 = pneg %p180
        $region34: #{tpu_custom_call.1} parent=11 // pred_check_branch
          %400 = sbr.rel (%p398) target = $region36
        $region35: #{tpu_custom_call.1} parent=11 // pred_region
          _
        $region36: #{tpu_custom_call.1} parent=11 // pred_fallthru
          _
        // Predicated region
        $region37: #{tpu_custom_call.1} parent=11 // pred_check
          %p401 = pneg %p201
        $region38: #{tpu_custom_call.1} parent=11 // pred_check_branch
          %403 = sbr.rel (%p401) target = $region40
        $region39: #{tpu_custom_call.1} parent=11 // pred_region
          _
        $region40: #{tpu_custom_call.1} parent=11 // pred_fallthru
          _
        // Predicated region
        $region41: #{tpu_custom_call.1} parent=11 // pred_check
          %p404 = pneg %p222
        $region42: #{tpu_custom_call.1} parent=11 // pred_check_branch
          %406 = sbr.rel (%p404) target = $region44
        $region43: #{tpu_custom_call.1} parent=11 // pred_region
          _
        $region44: #{tpu_custom_call.1} parent=11 // pred_fallthru
          _
        // Predicated region
        $region45: #{tpu_custom_call.1} parent=11 // pred_check
          %p407 = pneg %p243
        $region46: #{tpu_custom_call.1} parent=11 // pred_check_branch
          %409 = sbr.rel (%p407) target = $region48
        $region47: #{tpu_custom_call.1} parent=11 // pred_region
          %s411 = ssub.s32 4096, 4096
          %412 = vsyncadd [#allocation16], %s411
          %s413 = sshll.u32 [#allocation15], 4
          %s414 = int_to_ptr.vmem [resolvable:$true] %s413
          %419 = dma.hbm_to_vmem [thread:$0]  %s9, 4096, %s414, [#allocation16], 256, 256, 16
        $region48: #{tpu_custom_call.1} parent=11 // pred_fallthru
          _
        // Predicated region
        $region49: #{tpu_custom_call.1} parent=11 // pred_check
          %p420 = pneg %p264
        $region50: #{tpu_custom_call.1} parent=11 // pred_check_branch
          %422 = sbr.rel (%p420) target = $region52
        $region51: #{tpu_custom_call.1} parent=11 // pred_region
          _
        $region52: #{tpu_custom_call.1} parent=11 // pred_fallthru
          _
        // Predicated region
        $region53: #{tpu_custom_call.1} parent=11 // pred_check
          %p423 = pneg %p285
        $region54: #{tpu_custom_call.1} parent=11 // pred_check_branch
          %425 = sbr.rel (%p423) target = $region56
        $region55: #{tpu_custom_call.1} parent=11 // pred_region
          %s427 = ssub.s32 4096, 4096
          %428 = vsyncadd [#allocation16], %s427
          %s429 = sshll.u32 [#allocation17], 4
          %s430 = int_to_ptr.vmem [resolvable:$true] %s429
          %435 = dma.hbm_to_vmem [thread:$0]  %s11, 4096, %s430, [#allocation16], 64, 64, 4
        $region56: #{tpu_custom_call.1} parent=11 // pred_fallthru
          _
        // Predicated region
        $region57: #{tpu_custom_call.1} parent=11 // pred_check
          %p436 = pneg %p306
        $region58: #{tpu_custom_call.1} parent=11 // pred_check_branch
          %438 = sbr.rel (%p436) target = $region60
        $region59: #{tpu_custom_call.1} parent=11 // pred_region
          _
        $region60: #{tpu_custom_call.1} parent=11 // pred_fallthru
          _
      $region12: #{tpu_custom_call.1} parent=5 // pred_fallthru
        _
      %p439 = scmp.lt.s32.totalorder %s28, 2
      // Predicated region
      $region61: #{tpu_custom_call.1} parent=5 // pred_check
        %p440 = pneg %p439
      $region62: #{tpu_custom_call.1} parent=5 // pred_check_branch
        %442 = sbr.rel (%p440) target = $region64
      $region63: #{tpu_custom_call.1} parent=5 // pred_region
        // Predicated region
        $region65: #{tpu_custom_call.1} parent=63 // pred_check
          %p443 = pneg %p48
        $region66: #{tpu_custom_call.1} parent=63 // pred_check_branch
          %445 = sbr.rel (%p443) target = $region68
        $region67: #{tpu_custom_call.1} parent=63 // pred_region
          %s446 = sand.u32 %s38, 1
          %s447 = scalar_lea.sflag [#allocation7], %s446
          %s448 = sand.u32 %s38, 1
          %s449 = smul.addr %s448, 16
          %s450 = scalar_lea.vmem [#allocation6], %s449
          %s452 = ssub.s32 256, 256
          %453 = vsyncadd %s447, %s452
          %s454 = smul.addr %s28, 2
          %s455 = smul.addr %s454, 128
          %s456 = scalar_lea.hbm %s0, %s455
          %s457 = sshll.u32 %s450, 4
          %s458 = int_to_ptr.vmem [resolvable:$true] %s457
          %463 = dma.hbm_to_vmem [thread:$0]  %s456, 256, %s458, %s447, 128, 128, 8
        $region68: #{tpu_custom_call.1} parent=63 // pred_fallthru
          _
      $region64: #{tpu_custom_call.1} parent=5 // pred_fallthru
        _
      %p464 = scmp.le.s32.totalorder 1, %s28
      %p465 = scmp.lt.s32.totalorder %s28, 3
      %p466 = pnand %p464, %p465
      %p467 = pneg %p466
      // Predicated region
      $region69: #{tpu_custom_call.1} parent=5 // pred_check
        _
      $region70: #{tpu_custom_call.1} parent=5 // pred_check_branch
        %469 = sbr.rel (%p466) target = $region72
      $region71: #{tpu_custom_call.1} parent=5 // pred_region
        %s470 = ssub.s32 %s28, 1
        %s471 = sand.u32 %s41, 1
        %s472 = scalar_lea.sflag [#allocation7], %s471
        %s473 = sand.u32 %s41, 1
        %s474 = smul.addr %s473, 16
        %s475 = scalar_lea.vmem [#allocation6], %s474
        // Predicated region
        $region73: #{tpu_custom_call.1} parent=71 // pred_check
          %p476 = pneg %p54
        $region74: #{tpu_custom_call.1} parent=71 // pred_check_branch
          %478 = sbr.rel (%p476) target = $region76
        $region75: #{tpu_custom_call.1} parent=71 // pred_region
          %479 = dma.done %s472, 256
        $region76: #{tpu_custom_call.1} parent=71 // pred_fallthru
          _
        // Predicated region
        $region77: #{tpu_custom_call.1} parent=71 // pred_check
          %p480 = pneg %p75
        $region78: #{tpu_custom_call.1} parent=71 // pred_check_branch
          %482 = sbr.rel (%p480) target = $region80
        $region79: #{tpu_custom_call.1} parent=71 // pred_region
          %483 = dma.done [#allocation10], 16
        $region80: #{tpu_custom_call.1} parent=71 // pred_fallthru
          _
        // Predicated region
        $region81: #{tpu_custom_call.1} parent=71 // pred_check
          %p484 = pneg %p96
        $region82: #{tpu_custom_call.1} parent=71 // pred_check_branch
          %486 = sbr.rel (%p484) target = $region84
        $region83: #{tpu_custom_call.1} parent=71 // pred_region
          %487 = dma.done [#allocation10], 16
        $region84: #{tpu_custom_call.1} parent=71 // pred_fallthru
          _
        // Predicated region
        $region85: #{tpu_custom_call.1} parent=71 // pred_check
          %p488 = pneg %p117
        $region86: #{tpu_custom_call.1} parent=71 // pred_check_branch
          %490 = sbr.rel (%p488) target = $region88
        $region87: #{tpu_custom_call.1} parent=71 // pred_region
          %491 = dma.done [#allocation13], 3072
        $region88: #{tpu_custom_call.1} parent=71 // pred_fallthru
          _
        // Predicated region
        $region89: #{tpu_custom_call.1} parent=71 // pred_check
          %p492 = pneg %p159
        $region90: #{tpu_custom_call.1} parent=71 // pred_check_branch
          %494 = sbr.rel (%p492) target = $region92
        $region91: #{tpu_custom_call.1} parent=71 // pred_region
          %495 = dma.done [#allocation13], 1024
        $region92: #{tpu_custom_call.1} parent=71 // pred_fallthru
          _
        // Predicated region
        $region93: #{tpu_custom_call.1} parent=71 // pred_check
          %p496 = pneg %p243
        $region94: #{tpu_custom_call.1} parent=71 // pred_check_branch
          %498 = sbr.rel (%p496) target = $region96
        $region95: #{tpu_custom_call.1} parent=71 // pred_region
          %499 = dma.done [#allocation16], 4096
        $region96: #{tpu_custom_call.1} parent=71 // pred_fallthru
          _
        // Predicated region
        $region97: #{tpu_custom_call.1} parent=71 // pred_check
          %p500 = pneg %p285
        $region98: #{tpu_custom_call.1} parent=71 // pred_check_branch
          %502 = sbr.rel (%p500) target = $region100
        $region99: #{tpu_custom_call.1} parent=71 // pred_region
          %503 = dma.done [#allocation16], 4096
        $region100: #{tpu_custom_call.1} parent=71 // pred_fallthru
          _
        %s504 = sand.u32 %s41, 1
        %s505 = scalar_lea.sflag [#allocation7], %s504
        %s506 = sand.u32 %s41, 1
        %s507 = smul.addr %s506, 16
        %s508 = scalar_lea.vmem [#allocation6], %s507
        %p509 = pneg %p54
        %p510 = pneg %p51
        %p511 = pneg %p75
        %p512 = pneg %p72
        %p513 = pneg %p96
        %p514 = pneg %p93
        %p515 = pneg %p117
        %p516 = pneg %p114
        %p517 = pneg %p138
        %p518 = pneg %p135
        %p519 = pneg %p159
        %p520 = pneg %p156
        %p521 = pneg %p180
        %p522 = pneg %p177
        %p523 = pneg %p201
        %p524 = pneg %p198
        %p525 = pneg %p222
        %p526 = pneg %p219
        %p527 = pneg %p243
        %p528 = pneg %p240
        %p529 = pneg %p264
        %p530 = pneg %p261
        %p531 = pneg %p285
        %p532 = pneg %p282
        %p533 = pneg %p306
        %p534 = pneg %p303
        %p535 = pneg %p332
        %p536 = pneg %p329
        %s537 = sand.u32 %s319, 1
        %s538 = scalar_lea.sflag [#allocation8], %s537
        %s539 = sand.u32 %s319, 1
        %s540 = smul.addr %s539, 16
        %s541 = scalar_lea.vmem [#allocation18], %s540
        %v543 = vld [vmem:[%s475] sm:$0xff]
        %v544 = vld [vmem:[%s475 + $0x8] sm:$0xff]
        %545 = vadd.xlane.f32.xlu0 %v543
        %v546 = vpop.xlane.xlu0 %545
        %547 = vadd.xlane.f32.xlu0 %v544
        %v548 = vpop.xlane.xlu0 %547
        %v549 = vrcp.pop 128.0
        %v550 = vmul.f32 %v546, %v549
        %v551 = vmul.f32 %v548, %v549
        %v552 = vsub.f32 %v543, %v550
        %v553 = vsub.f32 %v544, %v551
        %v554 = vmul.f32 %v552, %v552
        %v555 = vmul.f32 %v553, %v553
        %556 = vadd.xlane.f32.xlu0 %v554
        %v557 = vpop.xlane.xlu0 %556
        %558 = vadd.xlane.f32.xlu0 %v555
        %v559 = vpop.xlane.xlu0 %558
        %v560 = vmul.f32 %v557, %v549
        %v561 = vmul.f32 %v559, %v549
        %v562 = vadd.f32 %v560, 1e-12
        %v563 = vadd.f32 %v561, 1e-12
        %v564 = vrsqrt.pop %v562
        %v565 = vrsqrt.pop %v563
        %v566 = vmul.f32 %v552, %v564
        %v567 = vmul.f32 %v553, %v565
        %v568 = vld [vmem:[#allocation9] sm:$0x1]
        %v570 = vlaneseq
        %v571 = vshrl.u32 %v570, 7
        %v572 = vsub.s32 0, %v571
        %v573 = vrot.slane %v568, %v572
        %v575 = vmul.f32 %v573, %v566
        %v576 = vmul.f32 %v573, %v567
        %v577 = vld [vmem:[#allocation11] sm:$0x1]
        %v579 = vlaneseq
        %v580 = vshrl.u32 %v579, 7
        %v581 = vsub.s32 0, %v580
        %v582 = vrot.slane %v577, %v581
        %v584 = vadd.f32 %v575, %v582
        %v585 = vadd.f32 %v576, %v582
        %v586 = vpack.c.bf16 %v585, %v584
        %v587 = vld [vmem:[#allocation12] sm:$0xff]
        %v588 = vld [vmem:[#allocation12 + $0x8] sm:$0xf]
        %v589 = vld [vmem:[#allocation12 + $0xc] sm:$0xff]
        %v590 = vld [vmem:[#allocation12 + $0x14] sm:$0xf]
        %v591 = vld [vmem:[#allocation12 + $0x18] sm:$0xff]
        %v592 = vld [vmem:[#allocation12 + $0x20] sm:$0xf]
        %v593 = vld [vmem:[#allocation12 + $0x24] sm:$0xff]
        %v594 = vld [vmem:[#allocation12 + $0x2c] sm:$0xf]
        %v595 = vld [vmem:[#allocation12 + $0x30] sm:$0xff]
        %v596 = vld [vmem:[#allocation12 + $0x38] sm:$0xf]
        %v597 = vld [vmem:[#allocation12 + $0x3c] sm:$0xff]
        %v598 = vld [vmem:[#allocation12 + $0x44] sm:$0xf]
        %v599 = vld [vmem:[#allocation12 + $0x48] sm:$0xff]
        %v600 = vld [vmem:[#allocation12 + $0x50] sm:$0xf]
        %v601 = vld [vmem:[#allocation12 + $0x54] sm:$0xff]
        %v602 = vld [vmem:[#allocation12 + $0x5c] sm:$0xf]
        %v603 = vld [vmem:[#allocation12 + $0x60] sm:$0xff]
        %v604 = vld [vmem:[#allocation12 + $0x68] sm:$0xf]
        %v605 = vld [vmem:[#allocation12 + $0x6c] sm:$0xff]
        %v606 = vld [vmem:[#allocation12 + $0x74] sm:$0xf]
        %v607 = vld [vmem:[#allocation12 + $0x78] sm:$0xff]
        %v608 = vld [vmem:[#allocation12 + $0x80] sm:$0xf]
        %v609 = vld [vmem:[#allocation12 + $0x84] sm:$0xff]
        %v610 = vld [vmem:[#allocation12 + $0x8c] sm:$0xf]
        %v611 = vld [vmem:[#allocation12 + $0x90] sm:$0xff]
        %v612 = vld [vmem:[#allocation12 + $0x98] sm:$0xf]
        %v613 = vld [vmem:[#allocation12 + $0x9c] sm:$0xff]
        %v614 = vld [vmem:[#allocation12 + $0xa4] sm:$0xf]
        %v615 = vld [vmem:[#allocation12 + $0xa8] sm:$0xff]
        %v616 = vld [vmem:[#allocation12 + $0xb0] sm:$0xf]
        %v617 = vld [vmem:[#allocation12 + $0xb4] sm:$0xff]
        %v618 = vld [vmem:[#allocation12 + $0xbc] sm:$0xf]
        %v619 = vld [vmem:[%s4] sm:$0x7]
        %v621 = vlaneseq
        %v622 = vshrl.u32 %v621, 7
        %v623 = vsub.s32 0, %v622
        %v624 = vrot.slane %v619, %v623
        %v625 = vlaneseq
        %v626 = vshrl.u32 %v625, 7
        %v627 = vsub.s32 1, %v626
        %v628 = vrot.slane %v619, %v627
        %v629 = vlaneseq
        %v630 = vshrl.u32 %v629, 7
        %v631 = vsub.s32 2, %v630
        %v632 = vrot.slane %v619, %v631
        %v668 = vunpack.c.l.b16 %v587
        %v669 = vunpack.c.h.b16 %v587
        %v670 = vunpack.c.l.b16 %v588
        %v671 = vunpack.c.l.b16 %v589
        %v672 = vunpack.c.h.b16 %v589
        %v673 = vunpack.c.l.b16 %v590
        %v674 = vunpack.c.l.b16 %v591
        %v675 = vunpack.c.h.b16 %v591
        %v676 = vunpack.c.l.b16 %v592
        %v677 = vunpack.c.l.b16 %v593
        %v678 = vunpack.c.h.b16 %v593
        %v679 = vunpack.c.l.b16 %v594
        %v680 = vunpack.c.l.b16 %v595
        %v681 = vunpack.c.h.b16 %v595
        %v682 = vunpack.c.l.b16 %v596
        %v683 = vunpack.c.l.b16 %v597
        %v684 = vunpack.c.h.b16 %v597
        %v685 = vunpack.c.l.b16 %v598
        %v686 = vunpack.c.l.b16 %v599
        %v687 = vunpack.c.h.b16 %v599
        %v688 = vunpack.c.l.b16 %v600
        %v689 = vunpack.c.l.b16 %v601
        %v690 = vunpack.c.h.b16 %v601
        %v691 = vunpack.c.l.b16 %v602
        %v692 = vunpack.c.l.b16 %v603
        %v693 = vunpack.c.h.b16 %v603
        %v694 = vunpack.c.l.b16 %v604
        %v695 = vunpack.c.l.b16 %v605
        %v696 = vunpack.c.h.b16 %v605
        %v697 = vunpack.c.l.b16 %v606
        %v698 = vunpack.c.l.b16 %v607
        %v699 = vunpack.c.h.b16 %v607
        %v700 = vunpack.c.l.b16 %v608
        %v701 = vunpack.c.l.b16 %v609
        %v702 = vunpack.c.h.b16 %v609
        %v703 = vunpack.c.l.b16 %v610
        %v704 = vunpack.c.l.b16 %v611
        %v705 = vunpack.c.h.b16 %v611
        %v706 = vunpack.c.l.b16 %v612
        %v707 = vunpack.c.l.b16 %v613
        %v708 = vunpack.c.h.b16 %v613
        %v709 = vunpack.c.l.b16 %v614
        %v710 = vunpack.c.l.b16 %v615
        %v711 = vunpack.c.h.b16 %v615
        %v712 = vunpack.c.l.b16 %v616
        %v713 = vunpack.c.l.b16 %v617
        %v714 = vunpack.c.h.b16 %v617
        %v715 = vunpack.c.l.b16 %v618
        %v716 = vpack.c.b16 %v671, %v668
        %v717 = vpack.c.b16 %v672, %v669
        %v718 = vpack.c.b16 %v673, %v670
        %v719 = vpack.c.b16 %v677, %v674
        %v720 = vpack.c.b16 %v678, %v675
        %v721 = vpack.c.b16 %v679, %v676
        %v722 = vpack.c.b16 %v683, %v680
        %v723 = vpack.c.b16 %v684, %v681
        %v724 = vpack.c.b16 %v685, %v682
        %v725 = vpack.c.b16 %v689, %v686
        %v726 = vpack.c.b16 %v690, %v687
        %v727 = vpack.c.b16 %v691, %v688
        %v728 = vpack.c.b16 %v695, %v692
        %v729 = vpack.c.b16 %v696, %v693
        %v730 = vpack.c.b16 %v697, %v694
        %v731 = vpack.c.b16 %v701, %v698
        %v732 = vpack.c.b16 %v702, %v699
        %v733 = vpack.c.b16 %v703, %v700
        %v734 = vpack.c.b16 %v707, %v704
        %v735 = vpack.c.b16 %v708, %v705
        %v736 = vpack.c.b16 %v709, %v706
        %v737 = vpack.c.b16 %v713, %v710
        %v738 = vpack.c.b16 %v714, %v711
        %v739 = vpack.c.b16 %v715, %v712
        %764 = vmatprep.subr.bf16.mxu0 %v717
        %765 = vmatpush1.bf16.msra.mxu0 %v716
        %766 = vmatprep.subr.bf16.mxu0 %v720
        %767 = vmatpush1.bf16.msra.mxu0 %v719
        %768 = vmatprep.subr.bf16.mxu0 %v723
        %769 = vmatpush1.bf16.msra.mxu0 %v722
        %770 = vmatprep.subr.bf16.mxu0 %v726
        %771 = vmatpush1.bf16.msra.mxu0 %v725
        %772 = vmatprep.subr.bf16.mxu0 %v729
        %773 = vmatpush1.bf16.msra.mxu0 %v728
        %774 = vmatprep.subr.bf16.mxu0 %v732
        %775 = vmatpush1.bf16.msra.mxu0 %v731
        %776 = vmatprep.subr.bf16.mxu0 %v735
        %777 = vmatpush1.bf16.msra.mxu0 %v734
        %778 = vmatprep.subr.bf16.mxu0 %v738
        %779 = vmatpush1.bf16.msra.mxu0 %v737
        %780 = vmatprep.subr.bf16.mxu0 0
        %781 = vmatpush1.bf16.msra.mxu0 0
        %782 = vmatprep.subr.bf16.mxu0 0
        %783 = vmatpush1.bf16.msra.mxu0 0
        %784 = vmatprep.subr.bf16.mxu0 0
        %785 = vmatpush1.bf16.msra.mxu0 0
        %786 = vmatprep.subr.bf16.mxu0 0
        %787 = vmatpush1.bf16.msra.mxu0 0
        %788 = vmatprep.subr.bf16.mxu0 0
        %789 = vmatpush1.bf16.msra.mxu0 0
        %790 = vmatprep.subr.bf16.mxu0 0
        %791 = vmatpush1.bf16.msra.mxu0 0
        %792 = vmatprep.subr.bf16.mxu0 0
        %793 = vmatpush1.bf16.msra.mxu0 0
        %794 = vmatprep.subr.bf16.mxu0 0
        %795 = vmatpush1.bf16.msra.mxu0 0
        %796 = vmatprep.mubr.bf16.mxu0 0
        %797 = vmatmul.mubr.bf16.gmra.mrb[0].mxu0 %v586
        %v798 = vpop.f32.mrb[0].mxu0
        %v799 = vadd.f32 %v624, %v798
        %v800 = vpop.f32.mrb[0].mxu0
        %v801 = vadd.f32 %v628, %v800
        %v802 = vpop.f32.mrb[0].mxu0
        %v803 = vadd.f32 %v624, %v802
        %v804 = vpop.f32.mrb[0].mxu0
        %v805 = vadd.f32 %v628, %v804
        %806 = vdwg.mxu0
        %807 = vmatprep.subr.bf16.mxu0 0
        %808 = vmatpush1.bf16.msra.mxu0 %v718
        %809 = vmatprep.subr.bf16.mxu0 0
        %810 = vmatpush1.bf16.msra.mxu0 %v721
        %811 = vmatprep.subr.bf16.mxu0 0
        %812 = vmatpush1.bf16.msra.mxu0 %v724
        %813 = vmatprep.subr.bf16.mxu0 0
        %814 = vmatpush1.bf16.msra.mxu0 %v727
        %815 = vmatprep.subr.bf16.mxu0 0
        %816 = vmatpush1.bf16.msra.mxu0 %v730
        %817 = vmatprep.subr.bf16.mxu0 0
        %818 = vmatpush1.bf16.msra.mxu0 %v733
        %819 = vmatprep.subr.bf16.mxu0 0
        %820 = vmatpush1.bf16.msra.mxu0 %v736
        %821 = vmatprep.subr.bf16.mxu0 0
        %822 = vmatpush1.bf16.msra.mxu0 %v739
        %823 = vmatprep.subr.bf16.mxu0 0
        %824 = vmatpush1.bf16.msra.mxu0 0
        %825 = vmatprep.subr.bf16.mxu0 0
        %826 = vmatpush1.bf16.msra.mxu0 0
        %827 = vmatprep.subr.bf16.mxu0 0
        %828 = vmatpush1.bf16.msra.mxu0 0
        %829 = vmatprep.subr.bf16.mxu0 0
        %830 = vmatpush1.bf16.msra.mxu0 0
        %831 = vmatprep.subr.bf16.mxu0 0
        %832 = vmatpush1.bf16.msra.mxu0 0
        %833 = vmatprep.subr.bf16.mxu0 0
        %834 = vmatpush1.bf16.msra.mxu0 0
        %835 = vmatprep.subr.bf16.mxu0 0
        %836 = vmatpush1.bf16.msra.mxu0 0
        %837 = vmatprep.subr.bf16.mxu0 0
        %838 = vmatpush1.bf16.msra.mxu0 0
        %839 = vmatprep.mubr.bf16.mxu0 0
        %840 = vmatmul.mubr.bf16.gmra.mrb[0].mxu0 %v586
        %v841 = vpop.f32.mrb[0].mxu0
        %v842 = vadd.f32 %v632, %v841
        %v843 = vpop.f32.mrb[0].mxu0
        %v844 = vpop.f32.mrb[0].mxu0
        %v845 = vadd.f32 %v632, %v844
        %v846 = vpop.f32.mrb[0].mxu0
        %847 = vdwg.mxu0
        %v848 = vmul.f32 %v799, 0.17677669
        %v849 = vmul.f32 %v803, 0.17677669
        %v850 = vpack.c.bf16 %v849, %v848
        %vm851 = vcmask 261120
        %852 = vst.msk [vmem:[#allocation2] sm:$0xff] %vm851, %v850
        %v853 = vpack.c.bf16 %v805, %v801
        %854 = vst.msk [vmem:[#allocation3] sm:$0xff] %vm851, %v853
        %v855 = vpack.c.bf16 %v845, %v842
        %856 = vst.msk [vmem:[#allocation4] sm:$0xff] %vm851, %v855
        %858 = vrot.lane.b32.xlu0 %v850, 96
        %v859 = vpop.permute.xlu0 %858
        %s861 = scalar_lea.vmem [#allocation2], 8
        %862 = vst.msk [vmem:[%s861] sm:$0xff] %vm851, %v859
        %864 = vrot.lane.b32.xlu0 %v853, 96
        %v865 = vpop.permute.xlu0 %864
        %s867 = scalar_lea.vmem [#allocation3], 8
        %868 = vst.msk [vmem:[%s867] sm:$0xff] %vm851, %v865
        %870 = vrot.lane.b32.xlu0 %v855, 96
        %v871 = vpop.permute.xlu0 %870
        %s873 = scalar_lea.vmem [#allocation4], 8
        %874 = vst.msk [vmem:[%s873] sm:$0xff] %vm851, %v871
        %875 = vrot.lane.b32.xlu0 %v850, 64
        %v876 = vpop.permute.xlu0 %875
        %s878 = scalar_lea.vmem [#allocation2], 16
        %879 = vst.msk [vmem:[%s878] sm:$0xff] %vm851, %v876
        %880 = vrot.lane.b32.xlu0 %v853, 64
        %v881 = vpop.permute.xlu0 %880
        %s883 = scalar_lea.vmem [#allocation3], 16
        %884 = vst.msk [vmem:[%s883] sm:$0xff] %vm851, %v881
        %885 = vrot.lane.b32.xlu0 %v855, 64
        %v886 = vpop.permute.xlu0 %885
        %s888 = scalar_lea.vmem [#allocation4], 16
        %889 = vst.msk [vmem:[%s888] sm:$0xff] %vm851, %v886
        %890 = vrot.lane.b32.xlu0 %v850, 32
        %v891 = vpop.permute.xlu0 %890
        %s893 = scalar_lea.vmem [#allocation2], 24
        %894 = vst.msk [vmem:[%s893] sm:$0xff] %vm851, %v891
        %895 = vrot.lane.b32.xlu0 %v853, 32
        %v896 = vpop.permute.xlu0 %895
        %s898 = scalar_lea.vmem [#allocation3], 24
        %899 = vst.msk [vmem:[%s898] sm:$0xff] %vm851, %v896
        %900 = vrot.lane.b32.xlu0 %v855, 32
        %v901 = vpop.permute.xlu0 %900
        %s903 = scalar_lea.vmem [#allocation4], 24
        %904 = vst.msk [vmem:[%s903] sm:$0xff] %vm851, %v901
        %v905 = vld [vmem:[#allocation2] sm:$0xff]
        %v906 = vld [vmem:[#allocation2 + $0x8] sm:$0xff]
        %v907 = vld [vmem:[#allocation2 + $0x10] sm:$0xff]
        %v908 = vld [vmem:[#allocation2 + $0x18] sm:$0xff]
        %v909 = vld [vmem:[#allocation3] sm:$0xff]
        %v910 = vld [vmem:[#allocation3 + $0x8] sm:$0xff]
        %v911 = vld [vmem:[#allocation3 + $0x10] sm:$0xff]
        %v912 = vld [vmem:[#allocation3 + $0x18] sm:$0xff]
        %v914 = vsel %vm851, %v905, 0
        %v917 = vsel %vm851, %v909, 0
        %919 = vmatprep.subr.bf16.mxu0 0
        %920 = vmatpush1.bf16.xpose.msra.mxu0 %v917
        %921 = vmatprep.subr.bf16.mxu0 0
        %922 = vmatpush1.bf16.xpose.msra.mxu0 0
        %923 = vmatprep.subr.bf16.mxu0 0
        %924 = vmatpush1.bf16.xpose.msra.mxu0 0
        %925 = vmatprep.subr.bf16.mxu0 0
        %926 = vmatpush1.bf16.xpose.msra.mxu0 0
        %927 = vmatprep.subr.bf16.mxu0 0
        %928 = vmatpush1.bf16.xpose.msra.mxu0 0
        %929 = vmatprep.subr.bf16.mxu0 0
        %930 = vmatpush1.bf16.xpose.msra.mxu0 0
        %931 = vmatprep.subr.bf16.mxu0 0
        %932 = vmatpush1.bf16.xpose.msra.mxu0 0
        %933 = vmatprep.subr.bf16.mxu0 0
        %934 = vmatpush1.bf16.xpose.msra.mxu0 0
        %935 = vmatprep.subr.bf16.mxu0 0
        %936 = vmatpush1.bf16.xpose.msra.mxu0 0
        %937 = vmatprep.subr.bf16.mxu0 0
        %938 = vmatpush1.bf16.xpose.msra.mxu0 0
        %939 = vmatprep.subr.bf16.mxu0 0
        %940 = vmatpush1.bf16.xpose.msra.mxu0 0
        %941 = vmatprep.subr.bf16.mxu0 0
        %942 = vmatpush1.bf16.xpose.msra.mxu0 0
        %943 = vmatprep.subr.bf16.mxu0 0
        %944 = vmatpush1.bf16.xpose.msra.mxu0 0
        %945 = vmatprep.subr.bf16.mxu0 0
        %946 = vmatpush1.bf16.xpose.msra.mxu0 0
        %947 = vmatprep.subr.bf16.mxu0 0
        %948 = vmatpush1.bf16.xpose.msra.mxu0 0
        %949 = vmatprep.subr.bf16.mxu0 0
        %950 = vmatpush1.bf16.xpose.msra.mxu0 0
        %951 = vmatprep.mubr.bf16.mxu0 0
        %952 = vmatmul.mubr.bf16.gmra.mrb[0].mxu0 %v914
        %v953 = vpop.f32.mrb[0].mxu0
        %v954 = vadd.f32 0.0, %v953
        %v955 = vpop.f32.mrb[0].mxu0
        %v956 = vpop.f32.mrb[0].mxu0
        %v957 = vadd.f32 0.0, %v956
        %v958 = vpop.f32.mrb[0].mxu0
        %959 = vdwg.mxu0
        %v961 = vsel %vm851, %v906, 0
        %v964 = vsel %vm851, %v910, 0
        %966 = vmatprep.subr.bf16.mxu0 0
        %967 = vmatpush1.bf16.xpose.msra.mxu0 %v964
        %968 = vmatprep.subr.bf16.mxu0 0
        %969 = vmatpush1.bf16.xpose.msra.mxu0 0
        %970 = vmatprep.subr.bf16.mxu0 0
        %971 = vmatpush1.bf16.xpose.msra.mxu0 0
        %972 = vmatprep.subr.bf16.mxu0 0
        %973 = vmatpush1.bf16.xpose.msra.mxu0 0
        %974 = vmatprep.subr.bf16.mxu0 0
        %975 = vmatpush1.bf16.xpose.msra.mxu0 0
        %976 = vmatprep.subr.bf16.mxu0 0
        %977 = vmatpush1.bf16.xpose.msra.mxu0 0
        %978 = vmatprep.subr.bf16.mxu0 0
        %979 = vmatpush1.bf16.xpose.msra.mxu0 0
        %980 = vmatprep.subr.bf16.mxu0 0
        %981 = vmatpush1.bf16.xpose.msra.mxu0 0
        %982 = vmatprep.subr.bf16.mxu0 0
        %983 = vmatpush1.bf16.xpose.msra.mxu0 0
        %984 = vmatprep.subr.bf16.mxu0 0
        %985 = vmatpush1.bf16.xpose.msra.mxu0 0
        %986 = vmatprep.subr.bf16.mxu0 0
        %987 = vmatpush1.bf16.xpose.msra.mxu0 0
        %988 = vmatprep.subr.bf16.mxu0 0
        %989 = vmatpush1.bf16.xpose.msra.mxu0 0
        %990 = vmatprep.subr.bf16.mxu0 0
        %991 = vmatpush1.bf16.xpose.msra.mxu0 0
        %992 = vmatprep.subr.bf16.mxu0 0
        %993 = vmatpush1.bf16.xpose.msra.mxu0 0
        %994 = vmatprep.subr.bf16.mxu0 0
        %995 = vmatpush1.bf16.xpose.msra.mxu0 0
        %996 = vmatprep.subr.bf16.mxu0 0
        %997 = vmatpush1.bf16.xpose.msra.mxu0 0
        %998 = vmatprep.mubr.bf16.mxu0 0
        %999 = vmatmul.mubr.bf16.gmra.mrb[0].mxu0 %v961
        %v1000 = vpop.f32.mrb[0].mxu0
        %v1001 = vadd.f32 0.0, %v1000
        %v1002 = vpop.f32.mrb[0].mxu0
        %v1003 = vpop.f32.mrb[0].mxu0
        %v1004 = vadd.f32 0.0, %v1003
        %v1005 = vpop.f32.mrb[0].mxu0
        %1006 = vdwg.mxu0
        %v1008 = vsel %vm851, %v907, 0
        %v1011 = vsel %vm851, %v911, 0
        %1013 = vmatprep.subr.bf16.mxu0 0
        %1014 = vmatpush1.bf16.xpose.msra.mxu0 %v1011
        %1015 = vmatprep.subr.bf16.mxu0 0
        %1016 = vmatpush1.bf16.xpose.msra.mxu0 0
        %1017 = vmatprep.subr.bf16.mxu0 0
        %1018 = vmatpush1.bf16.xpose.msra.mxu0 0
        %1019 = vmatprep.subr.bf16.mxu0 0
        %1020 = vmatpush1.bf16.xpose.msra.mxu0 0
        %1021 = vmatprep.subr.bf16.mxu0 0
        %1022 = vmatpush1.bf16.xpose.msra.mxu0 0
        %1023 = vmatprep.subr.bf16.mxu0 0
        %1024 = vmatpush1.bf16.xpose.msra.mxu0 0
        %1025 = vmatprep.subr.bf16.mxu0 0
        %1026 = vmatpush1.bf16.xpose.msra.mxu0 0
        %1027 = vmatprep.subr.bf16.mxu0 0
        %1028 = vmatpush1.bf16.xpose.msra.mxu0 0
        %1029 = vmatprep.subr.bf16.mxu0 0
        %1030 = vmatpush1.bf16.xpose.msra.mxu0 0
        %1031 = vmatprep.subr.bf16.mxu0 0
        %1032 = vmatpush1.bf16.xpose.msra.mxu0 0
        %1033 = vmatprep.subr.bf16.mxu0 0
        %1034 = vmatpush1.bf16.xpose.msra.mxu0 0
        %1035 = vmatprep.subr.bf16.mxu0 0
        %1036 = vmatpush1.bf16.xpose.msra.mxu0 0
        %1037 = vmatprep.subr.bf16.mxu0 0
        %1038 = vmatpush1.bf16.xpose.msra.mxu0 0
        %1039 = vmatprep.subr.bf16.mxu0 0
        %1040 = vmatpush1.bf16.xpose.msra.mxu0 0
        %1041 = vmatprep.subr.bf16.mxu0 0
        %1042 = vmatpush1.bf16.xpose.msra.mxu0 0
        %1043 = vmatprep.subr.bf16.mxu0 0
        %1044 = vmatpush1.bf16.xpose.msra.mxu0 0
        %1045 = vmatprep.mubr.bf16.mxu0 0
        %1046 = vmatmul.mubr.bf16.gmra.mrb[0].mxu0 %v1008
        %v1047 = vpop.f32.mrb[0].mxu0
        %v1048 = vadd.f32 0.0, %v1047
        %v1049 = vpop.f32.mrb[0].mxu0
        %v1050 = vpop.f32.mrb[0].mxu0
        %v1051 = vadd.f32 0.0, %v1050
        %v1052 = vpop.f32.mrb[0].mxu0
        %1053 = vdwg.mxu0
        %v1055 = vsel %vm851, %v908, 0
        %v1058 = vsel %vm851, %v912, 0
        %1060 = vmatprep.subr.bf16.mxu0 0
        %1061 = vmatpush1.bf16.xpose.msra.mxu0 %v1058
        %1062 = vmatprep.subr.bf16.mxu0 0
        %1063 = vmatpush1.bf16.xpose.msra.mxu0 0
        %1064 = vmatprep.subr.bf16.mxu0 0
        %1065 = vmatpush1.bf16.xpose.msra.mxu0 0
        %1066 = vmatprep.subr.bf16.mxu0 0
        %1067 = vmatpush1.bf16.xpose.msra.mxu0 0
        %1068 = vmatprep.subr.bf16.mxu0 0
        %1069 = vmatpush1.bf16.xpose.msra.mxu0 0
        %1070 = vmatprep.subr.bf16.mxu0 0
        %1071 = vmatpush1.bf16.xpose.msra.mxu0 0
        %1072 = vmatprep.subr.bf16.mxu0 0
        %1073 = vmatpush1.bf16.xpose.msra.mxu0 0
        %1074 = vmatprep.subr.bf16.mxu0 0
        %1075 = vmatpush1.bf16.xpose.msra.mxu0 0
        %1076 = vmatprep.subr.bf16.mxu0 0
        %1077 = vmatpush1.bf16.xpose.msra.mxu0 0
        %1078 = vmatprep.subr.bf16.mxu0 0
        %1079 = vmatpush1.bf16.xpose.msra.mxu0 0
        %1080 = vmatprep.subr.bf16.mxu0 0
        %1081 = vmatpush1.bf16.xpose.msra.mxu0 0
        %1082 = vmatprep.subr.bf16.mxu0 0
        %1083 = vmatpush1.bf16.xpose.msra.mxu0 0
        %1084 = vmatprep.subr.bf16.mxu0 0
        %1085 = vmatpush1.bf16.xpose.msra.mxu0 0
        %1086 = vmatprep.subr.bf16.mxu0 0
        %1087 = vmatpush1.bf16.xpose.msra.mxu0 0
        %1088 = vmatprep.subr.bf16.mxu0 0
        %1089 = vmatpush1.bf16.xpose.msra.mxu0 0
        %1090 = vmatprep.subr.bf16.mxu0 0
        %1091 = vmatpush1.bf16.xpose.msra.mxu0 0
        %1092 = vmatprep.mubr.bf16.mxu0 0
        %1093 = vmatmul.mubr.bf16.gmra.mrb[0].mxu0 %v1055
        %v1094 = vpop.f32.mrb[0].mxu0
        %v1095 = vadd.f32 0.0, %v1094
        %v1096 = vpop.f32.mrb[0].mxu0
        %v1097 = vpop.f32.mrb[0].mxu0
        %v1098 = vadd.f32 0.0, %v1097
        %v1099 = vpop.f32.mrb[0].mxu0
        %1100 = vdwg.mxu0
        %vm1101 = vcmask 130048
        %v1102 = vsel %vm1101, %v954, -inf
        %1103 = vmax.xlane.f32.xlu0 %v1102
        %v1104 = vpop.xlane.xlu0 %1103
        %v1105 = vsel %vm1101, %v957, -inf
        %1106 = vmax.xlane.f32.xlu0 %v1105
        %v1107 = vpop.xlane.xlu0 %1106
        %v1108 = vsel %vm1101, %v1001, -inf
        %1109 = vmax.xlane.f32.xlu0 %v1108
        %v1110 = vpop.xlane.xlu0 %1109
        %v1111 = vsel %vm1101, %v1004, -inf
        %1112 = vmax.xlane.f32.xlu0 %v1111
        %v1113 = vpop.xlane.xlu0 %1112
        %v1114 = vsel %vm1101, %v1048, -inf
        %1115 = vmax.xlane.f32.xlu0 %v1114
        %v1116 = vpop.xlane.xlu0 %1115
        %v1117 = vsel %vm1101, %v1051, -inf
        %1118 = vmax.xlane.f32.xlu0 %v1117
        %v1119 = vpop.xlane.xlu0 %1118
        %v1120 = vsel %vm1101, %v1095, -inf
        %1121 = vmax.xlane.f32.xlu0 %v1120
        %v1122 = vpop.xlane.xlu0 %1121
        %v1123 = vsel %vm1101, %v1098, -inf
        %1124 = vmax.xlane.f32.xlu0 %v1123
        %v1125 = vpop.xlane.xlu0 %1124
        %v1126 = vsub.f32 %v954, %v1104
        %v1127 = vsub.f32 %v957, %v1107
        %v1128 = vsub.f32 %v1001, %v1110
        %v1129 = vsub.f32 %v1004, %v1113
        %v1130 = vsub.f32 %v1048, %v1116
        %v1131 = vsub.f32 %v1051, %v1119
        %v1132 = vsub.f32 %v1095, %v1122
        %v1133 = vsub.f32 %v1098, %v1125
        %v1134 = vmul.f32 %v1126, 1.442695
        %v1135 = vpow.pop %v1134
        %v1136 = vmul.f32 %v1127, 1.442695
        %v1137 = vpow.pop %v1136
        %v1138 = vmul.f32 %v1128, 1.442695
        %v1139 = vpow.pop %v1138
        %v1140 = vmul.f32 %v1129, 1.442695
        %v1141 = vpow.pop %v1140
        %v1142 = vmul.f32 %v1130, 1.442695
        %v1143 = vpow.pop %v1142
        %v1144 = vmul.f32 %v1131, 1.442695
        %v1145 = vpow.pop %v1144
        %v1146 = vmul.f32 %v1132, 1.442695
        %v1147 = vpow.pop %v1146
        %v1148 = vmul.f32 %v1133, 1.442695
        %v1149 = vpow.pop %v1148
        %v1150 = vsel %vm1101, %v1135, 0.0
        %1151 = vadd.xlane.f32.xlu0 %v1150
        %v1152 = vpop.xlane.xlu0 %1151
        %v1153 = vsel %vm1101, %v1137, 0.0
        %1154 = vadd.xlane.f32.xlu0 %v1153
        %v1155 = vpop.xlane.xlu0 %1154
        %v1156 = vsel %vm1101, %v1139, 0.0
        %1157 = vadd.xlane.f32.xlu0 %v1156
        %v1158 = vpop.xlane.xlu0 %1157
        %v1159 = vsel %vm1101, %v1141, 0.0
        %1160 = vadd.xlane.f32.xlu0 %v1159
        %v1161 = vpop.xlane.xlu0 %1160
        %v1162 = vsel %vm1101, %v1143, 0.0
        %1163 = vadd.xlane.f32.xlu0 %v1162
        %v1164 = vpop.xlane.xlu0 %1163
        %v1165 = vsel %vm1101, %v1145, 0.0
        %1166 = vadd.xlane.f32.xlu0 %v1165
        %v1167 = vpop.xlane.xlu0 %1166
        %v1168 = vsel %vm1101, %v1147, 0.0
        %1169 = vadd.xlane.f32.xlu0 %v1168
        %v1170 = vpop.xlane.xlu0 %1169
        %v1171 = vsel %vm1101, %v1149, 0.0
        %1172 = vadd.xlane.f32.xlu0 %v1171
        %v1173 = vpop.xlane.xlu0 %1172
        %v1174 = vrcp.pop %v1152
        %v1175 = vrcp.pop %v1155
        %v1176 = vrcp.pop %v1158
        %v1177 = vrcp.pop %v1161
        %v1178 = vrcp.pop %v1164
        %v1179 = vrcp.pop %v1167
        %v1180 = vrcp.pop %v1170
        %v1181 = vrcp.pop %v1173
        %v1182 = vmul.f32 %v1135, %v1174
        %v1183 = vmul.f32 %v1137, %v1175
        %v1184 = vmul.f32 %v1139, %v1176
        %v1185 = vmul.f32 %v1141, %v1177
        %v1186 = vmul.f32 %v1143, %v1178
        %v1187 = vmul.f32 %v1145, %v1179
        %v1188 = vmul.f32 %v1147, %v1180
        %v1189 = vmul.f32 %v1149, %v1181
        %v1190 = vpack.c.bf16 %v1183, %v1182
        %v1191 = vpack.c.bf16 %v1185, %v1184
        %v1192 = vpack.c.bf16 %v1187, %v1186
        %v1193 = vpack.c.bf16 %v1189, %v1188
        %v1194 = vld [vmem:[#allocation4] sm:$0xff]
        %v1195 = vld [vmem:[#allocation4 + $0x8] sm:$0xff]
        %v1196 = vld [vmem:[#allocation4 + $0x10] sm:$0xff]
        %v1197 = vld [vmem:[#allocation4 + $0x18] sm:$0xff]
        %v1199 = vsel %vm1101, %v1190, 0
        %1201 = vmatprep.subr.bf16.mxu0 0
        %1202 = vmatpush1.bf16.msra.mxu0 %v1194
        %1203 = vmatprep.subr.bf16.mxu0 0
        %1204 = vmatpush1.bf16.msra.mxu0 0
        %1205 = vmatprep.subr.bf16.mxu0 0
        %1206 = vmatpush1.bf16.msra.mxu0 0
        %1207 = vmatprep.subr.bf16.mxu0 0
        %1208 = vmatpush1.bf16.msra.mxu0 0
        %1209 = vmatprep.subr.bf16.mxu0 0
        %1210 = vmatpush1.bf16.msra.mxu0 0
        %1211 = vmatprep.subr.bf16.mxu0 0
        %1212 = vmatpush1.bf16.msra.mxu0 0
        %1213 = vmatprep.subr.bf16.mxu0 0
        %1214 = vmatpush1.bf16.msra.mxu0 0
        %1215 = vmatprep.subr.bf16.mxu0 0
        %1216 = vmatpush1.bf16.msra.mxu0 0
        %1217 = vmatprep.subr.bf16.mxu0 0
        %1218 = vmatpush1.bf16.msra.mxu0 0
        %1219 = vmatprep.subr.bf16.mxu0 0
        %1220 = vmatpush1.bf16.msra.mxu0 0
        %1221 = vmatprep.subr.bf16.mxu0 0
        %1222 = vmatpush1.bf16.msra.mxu0 0
        %1223 = vmatprep.subr.bf16.mxu0 0
        %1224 = vmatpush1.bf16.msra.mxu0 0
        %1225 = vmatprep.subr.bf16.mxu0 0
        %1226 = vmatpush1.bf16.msra.mxu0 0
        %1227 = vmatprep.subr.bf16.mxu0 0
        %1228 = vmatpush1.bf16.msra.mxu0 0
        %1229 = vmatprep.subr.bf16.mxu0 0
        %1230 = vmatpush1.bf16.msra.mxu0 0
        %1231 = vmatprep.subr.bf16.mxu0 0
        %1232 = vmatpush1.bf16.msra.mxu0 0
        %1233 = vmatprep.mubr.bf16.mxu0 0
        %1234 = vmatmul.mubr.bf16.gmra.mrb[0].mxu0 %v1199
        %v1235 = vpop.f32.mrb[0].mxu0
        %v1236 = vadd.f32 0.0, %v1235
        %v1237 = vpop.f32.mrb[0].mxu0
        %v1238 = vpop.f32.mrb[0].mxu0
        %v1239 = vadd.f32 0.0, %v1238
        %v1240 = vpop.f32.mrb[0].mxu0
        %1241 = vdwg.mxu0
        %v1243 = vsel %vm1101, %v1191, 0
        %1245 = vmatprep.subr.bf16.mxu0 0
        %1246 = vmatpush1.bf16.msra.mxu0 %v1195
        %1247 = vmatprep.subr.bf16.mxu0 0
        %1248 = vmatpush1.bf16.msra.mxu0 0
        %1249 = vmatprep.subr.bf16.mxu0 0
        %1250 = vmatpush1.bf16.msra.mxu0 0
        %1251 = vmatprep.subr.bf16.mxu0 0
        %1252 = vmatpush1.bf16.msra.mxu0 0
        %1253 = vmatprep.subr.bf16.mxu0 0
        %1254 = vmatpush1.bf16.msra.mxu0 0
        %1255 = vmatprep.subr.bf16.mxu0 0
        %1256 = vmatpush1.bf16.msra.mxu0 0
        %1257 = vmatprep.subr.bf16.mxu0 0
        %1258 = vmatpush1.bf16.msra.mxu0 0
        %1259 = vmatprep.subr.bf16.mxu0 0
        %1260 = vmatpush1.bf16.msra.mxu0 0
        %1261 = vmatprep.subr.bf16.mxu0 0
        %1262 = vmatpush1.bf16.msra.mxu0 0
        %1263 = vmatprep.subr.bf16.mxu0 0
        %1264 = vmatpush1.bf16.msra.mxu0 0
        %1265 = vmatprep.subr.bf16.mxu0 0
        %1266 = vmatpush1.bf16.msra.mxu0 0
        %1267 = vmatprep.subr.bf16.mxu0 0
        %1268 = vmatpush1.bf16.msra.mxu0 0
        %1269 = vmatprep.subr.bf16.mxu0 0
        %1270 = vmatpush1.bf16.msra.mxu0 0
        %1271 = vmatprep.subr.bf16.mxu0 0
        %1272 = vmatpush1.bf16.msra.mxu0 0
        %1273 = vmatprep.subr.bf16.mxu0 0
        %1274 = vmatpush1.bf16.msra.mxu0 0
        %1275 = vmatprep.subr.bf16.mxu0 0
        %1276 = vmatpush1.bf16.msra.mxu0 0
        %1277 = vmatprep.mubr.bf16.mxu0 0
        %1278 = vmatmul.mubr.bf16.gmra.mrb[0].mxu0 %v1243
        %v1279 = vpop.f32.mrb[0].mxu0
        %v1280 = vadd.f32 0.0, %v1279
        %v1281 = vpop.f32.mrb[0].mxu0
        %v1282 = vpop.f32.mrb[0].mxu0
        %v1283 = vadd.f32 0.0, %v1282
        %v1284 = vpop.f32.mrb[0].mxu0
        %1285 = vdwg.mxu0
        %v1287 = vsel %vm1101, %v1192, 0
        %1289 = vmatprep.subr.bf16.mxu0 0
        %1290 = vmatpush1.bf16.msra.mxu0 %v1196
        %1291 = vmatprep.subr.bf16.mxu0 0
        %1292 = vmatpush1.bf16.msra.mxu0 0
        %1293 = vmatprep.subr.bf16.mxu0 0
        %1294 = vmatpush1.bf16.msra.mxu0 0
        %1295 = vmatprep.subr.bf16.mxu0 0
        %1296 = vmatpush1.bf16.msra.mxu0 0
        %1297 = vmatprep.subr.bf16.mxu0 0
        %1298 = vmatpush1.bf16.msra.mxu0 0
        %1299 = vmatprep.subr.bf16.mxu0 0
        %1300 = vmatpush1.bf16.msra.mxu0 0
        %1301 = vmatprep.subr.bf16.mxu0 0
        %1302 = vmatpush1.bf16.msra.mxu0 0
        %1303 = vmatprep.subr.bf16.mxu0 0
        %1304 = vmatpush1.bf16.msra.mxu0 0
        %1305 = vmatprep.subr.bf16.mxu0 0
        %1306 = vmatpush1.bf16.msra.mxu0 0
        %1307 = vmatprep.subr.bf16.mxu0 0
        %1308 = vmatpush1.bf16.msra.mxu0 0
        %1309 = vmatprep.subr.bf16.mxu0 0
        %1310 = vmatpush1.bf16.msra.mxu0 0
        %1311 = vmatprep.subr.bf16.mxu0 0
        %1312 = vmatpush1.bf16.msra.mxu0 0
        %1313 = vmatprep.subr.bf16.mxu0 0
        %1314 = vmatpush1.bf16.msra.mxu0 0
        %1315 = vmatprep.subr.bf16.mxu0 0
        %1316 = vmatpush1.bf16.msra.mxu0 0
        %1317 = vmatprep.subr.bf16.mxu0 0
        %1318 = vmatpush1.bf16.msra.mxu0 0
        %1319 = vmatprep.subr.bf16.mxu0 0
        %1320 = vmatpush1.bf16.msra.mxu0 0
        %1321 = vmatprep.mubr.bf16.mxu0 0
        %1322 = vmatmul.mubr.bf16.gmra.mrb[0].mxu0 %v1287
        %v1323 = vpop.f32.mrb[0].mxu0
        %v1324 = vadd.f32 0.0, %v1323
        %v1325 = vpop.f32.mrb[0].mxu0
        %v1326 = vpop.f32.mrb[0].mxu0
        %v1327 = vadd.f32 0.0, %v1326
        %v1328 = vpop.f32.mrb[0].mxu0
        %1329 = vdwg.mxu0
        %v1331 = vsel %vm1101, %v1193, 0
        %1333 = vmatprep.subr.bf16.mxu0 0
        %1334 = vmatpush1.bf16.msra.mxu0 %v1197
        %1335 = vmatprep.subr.bf16.mxu0 0
        %1336 = vmatpush1.bf16.msra.mxu0 0
        %1337 = vmatprep.subr.bf16.mxu0 0
        %1338 = vmatpush1.bf16.msra.mxu0 0
        %1339 = vmatprep.subr.bf16.mxu0 0
        %1340 = vmatpush1.bf16.msra.mxu0 0
        %1341 = vmatprep.subr.bf16.mxu0 0
        %1342 = vmatpush1.bf16.msra.mxu0 0
        %1343 = vmatprep.subr.bf16.mxu0 0
        %1344 = vmatpush1.bf16.msra.mxu0 0
        %1345 = vmatprep.subr.bf16.mxu0 0
        %1346 = vmatpush1.bf16.msra.mxu0 0
        %1347 = vmatprep.subr.bf16.mxu0 0
        %1348 = vmatpush1.bf16.msra.mxu0 0
        %1349 = vmatprep.subr.bf16.mxu0 0
        %1350 = vmatpush1.bf16.msra.mxu0 0
        %1351 = vmatprep.subr.bf16.mxu0 0
        %1352 = vmatpush1.bf16.msra.mxu0 0
        %1353 = vmatprep.subr.bf16.mxu0 0
        %1354 = vmatpush1.bf16.msra.mxu0 0
        %1355 = vmatprep.subr.bf16.mxu0 0
        %1356 = vmatpush1.bf16.msra.mxu0 0
        %1357 = vmatprep.subr.bf16.mxu0 0
        %1358 = vmatpush1.bf16.msra.mxu0 0
        %1359 = vmatprep.subr.bf16.mxu0 0
        %1360 = vmatpush1.bf16.msra.mxu0 0
        %1361 = vmatprep.subr.bf16.mxu0 0
        %1362 = vmatpush1.bf16.msra.mxu0 0
        %1363 = vmatprep.subr.bf16.mxu0 0
        %1364 = vmatpush1.bf16.msra.mxu0 0
        %1365 = vmatprep.mubr.bf16.mxu0 0
        %1366 = vmatmul.mubr.bf16.gmra.mrb[0].mxu0 %v1331
        %v1367 = vpop.f32.mrb[0].mxu0
        %v1368 = vadd.f32 0.0, %v1367
        %v1369 = vpop.f32.mrb[0].mxu0
        %v1370 = vpop.f32.mrb[0].mxu0
        %v1371 = vadd.f32 0.0, %v1370
        %v1372 = vpop.f32.mrb[0].mxu0
        %1373 = vdwg.mxu0
        %v1374 = vpack.c.bf16 %v1239, %v1236
        %1375 = vst.msk [vmem:[#allocation5] sm:$0xff] %vm851, %v1374
        %v1376 = vpack.c.bf16 %v1283, %v1280
        %1378 = vrot.lane.b32.xlu0 %v1376, 32
        %v1379 = vpop.permute.xlu0 %1378
        %vm1381 = vcmask 523520
        %1382 = vst.msk [vmem:[#allocation5] sm:$0xff] %vm1381, %v1379
        %v1383 = vpack.c.bf16 %v1327, %v1324
        %1385 = vrot.lane.b32.xlu0 %v1383, 64
        %v1386 = vpop.permute.xlu0 %1385
        %vm1388 = vcmask 785920
        %1389 = vst.msk [vmem:[#allocation5] sm:$0xff] %vm1388, %v1386
        %v1390 = vpack.c.bf16 %v1371, %v1368
        %1392 = vrot.lane.b32.xlu0 %v1390, 96
        %v1393 = vpop.permute.xlu0 %1392
        %vm1395 = vcmask 1048320
        %1396 = vst.msk [vmem:[#allocation5] sm:$0xff] %vm1395, %v1393
        %v1397 = vld [vmem:[#allocation5] sm:$0xff]
        %v1398 = vld [vmem:[#allocation14] sm:$0xf]
        %v1399 = vld [vmem:[#allocation14 + $0x4] sm:$0xf]
        %v1400 = vld [vmem:[#allocation14 + $0x8] sm:$0xf]
        %v1401 = vld [vmem:[#allocation14 + $0xc] sm:$0xf]
        %v1402 = vld [vmem:[#allocation14 + $0x10] sm:$0xf]
        %v1403 = vld [vmem:[#allocation14 + $0x14] sm:$0xf]
        %v1404 = vld [vmem:[#allocation14 + $0x18] sm:$0xf]
        %v1405 = vld [vmem:[#allocation14 + $0x1c] sm:$0xf]
        %v1406 = vld [vmem:[#allocation14 + $0x20] sm:$0xf]
        %v1407 = vld [vmem:[#allocation14 + $0x24] sm:$0xf]
        %v1408 = vld [vmem:[#allocation14 + $0x28] sm:$0xf]
        %v1409 = vld [vmem:[#allocation14 + $0x2c] sm:$0xf]
        %v1410 = vld [vmem:[#allocation14 + $0x30] sm:$0xf]
        %v1411 = vld [vmem:[#allocation14 + $0x34] sm:$0xf]
        %v1412 = vld [vmem:[#allocation14 + $0x38] sm:$0xf]
        %v1413 = vld [vmem:[#allocation14 + $0x3c] sm:$0xf]
        %v1414 = vld [vmem:[%s6] sm:$0x1]
        %v1416 = vlaneseq
        %v1417 = vshrl.u32 %v1416, 7
        %v1418 = vsub.s32 0, %v1417
        %v1419 = vrot.slane %v1414, %v1418
        %v1437 = vunpack.c.l.b16 %v1398
        %v1438 = vunpack.c.l.b16 %v1399
        %v1439 = vunpack.c.l.b16 %v1400
        %v1440 = vunpack.c.l.b16 %v1401
        %v1441 = vunpack.c.l.b16 %v1402
        %v1442 = vunpack.c.l.b16 %v1403
        %v1443 = vunpack.c.l.b16 %v1404
        %v1444 = vunpack.c.l.b16 %v1405
        %v1445 = vunpack.c.l.b16 %v1406
        %v1446 = vunpack.c.l.b16 %v1407
        %v1447 = vunpack.c.l.b16 %v1408
        %v1448 = vunpack.c.l.b16 %v1409
        %v1449 = vunpack.c.l.b16 %v1410
        %v1450 = vunpack.c.l.b16 %v1411
        %v1451 = vunpack.c.l.b16 %v1412
        %v1452 = vunpack.c.l.b16 %v1413
        %v1453 = vpack.c.b16 %v1438, %v1437
        %v1454 = vpack.c.b16 %v1440, %v1439
        %v1455 = vpack.c.b16 %v1442, %v1441
        %v1456 = vpack.c.b16 %v1444, %v1443
        %v1457 = vpack.c.b16 %v1446, %v1445
        %v1458 = vpack.c.b16 %v1448, %v1447
        %v1459 = vpack.c.b16 %v1450, %v1449
        %v1460 = vpack.c.b16 %v1452, %v1451
        %1469 = vmatprep.subr.bf16.mxu0 0
        %1470 = vmatpush1.bf16.msra.mxu0 %v1453
        %1471 = vmatprep.subr.bf16.mxu0 0
        %1472 = vmatpush1.bf16.msra.mxu0 %v1454
        %1473 = vmatprep.subr.bf16.mxu0 0
        %1474 = vmatpush1.bf16.msra.mxu0 %v1455
        %1475 = vmatprep.subr.bf16.mxu0 0
        %1476 = vmatpush1.bf16.msra.mxu0 %v1456
        %1477 = vmatprep.subr.bf16.mxu0 0
        %1478 = vmatpush1.bf16.msra.mxu0 %v1457
        %1479 = vmatprep.subr.bf16.mxu0 0
        %1480 = vmatpush1.bf16.msra.mxu0 %v1458
        %1481 = vmatprep.subr.bf16.mxu0 0
        %1482 = vmatpush1.bf16.msra.mxu0 %v1459
        %1483 = vmatprep.subr.bf16.mxu0 0
        %1484 = vmatpush1.bf16.msra.mxu0 %v1460
        %1485 = vmatprep.subr.bf16.mxu0 0
        %1486 = vmatpush1.bf16.msra.mxu0 0
        %1487 = vmatprep.subr.bf16.mxu0 0
        %1488 = vmatpush1.bf16.msra.mxu0 0
        %1489 = vmatprep.subr.bf16.mxu0 0
        %1490 = vmatpush1.bf16.msra.mxu0 0
        %1491 = vmatprep.subr.bf16.mxu0 0
        %1492 = vmatpush1.bf16.msra.mxu0 0
        %1493 = vmatprep.subr.bf16.mxu0 0
        %1494 = vmatpush1.bf16.msra.mxu0 0
        %1495 = vmatprep.subr.bf16.mxu0 0
        %1496 = vmatpush1.bf16.msra.mxu0 0
        %1497 = vmatprep.subr.bf16.mxu0 0
        %1498 = vmatpush1.bf16.msra.mxu0 0
        %1499 = vmatprep.subr.bf16.mxu0 0
        %1500 = vmatpush1.bf16.msra.mxu0 0
        %1501 = vmatprep.mubr.bf16.mxu0 0
        %1502 = vmatmul.mubr.bf16.gmra.mrb[0].mxu0 %v1397
        %v1503 = vpop.f32.mrb[0].mxu0
        %v1504 = vadd.f32 %v1419, %v1503
        %v1505 = vpop.f32.mrb[0].mxu0
        %v1506 = vpop.f32.mrb[0].mxu0
        %v1507 = vadd.f32 %v1419, %v1506
        %v1508 = vpop.f32.mrb[0].mxu0
        %1509 = vdwg.mxu0
        %v1510 = vadd.f32 %v543, %v1504
        %v1511 = vadd.f32 %v544, %v1507
        %1512 = vadd.xlane.f32.xlu0 %v1510
        %v1513 = vpop.xlane.xlu0 %1512
        %1514 = vadd.xlane.f32.xlu0 %v1511
        %v1515 = vpop.xlane.xlu0 %1514
        %v1516 = vmul.f32 %v1513, %v549
        %v1517 = vmul.f32 %v1515, %v549
        %v1518 = vsub.f32 %v1510, %v1516
        %v1519 = vsub.f32 %v1511, %v1517
        %v1520 = vmul.f32 %v1518, %v1518
        %v1521 = vmul.f32 %v1519, %v1519
        %1522 = vadd.xlane.f32.xlu0 %v1520
        %v1523 = vpop.xlane.xlu0 %1522
        %1524 = vadd.xlane.f32.xlu0 %v1521
        %v1525 = vpop.xlane.xlu0 %1524
        %v1526 = vmul.f32 %v1523, %v549
        %v1527 = vmul.f32 %v1525, %v549
        %v1528 = vadd.f32 %v1526, 1e-12
        %v1529 = vadd.f32 %v1527, 1e-12
        %v1530 = vrsqrt.pop %v1528
        %v1531 = vrsqrt.pop %v1529
        %v1532 = vmul.f32 %v1518, %v1530
        %v1533 = vmul.f32 %v1519, %v1531
        %v1534 = vld [vmem:[%s7] sm:$0x1]
        %v1536 = vlaneseq
        %v1537 = vshrl.u32 %v1536, 7
        %v1538 = vsub.s32 0, %v1537
        %v1539 = vrot.slane %v1534, %v1538
        %v1541 = vmul.f32 %v1539, %v1532
        %v1542 = vmul.f32 %v1539, %v1533
        %v1543 = vld [vmem:[%s8] sm:$0x1]
        %v1545 = vlaneseq
        %v1546 = vshrl.u32 %v1545, 7
        %v1547 = vsub.s32 0, %v1546
        %v1548 = vrot.slane %v1543, %v1547
        %v1550 = vadd.f32 %v1541, %v1548
        %v1551 = vadd.f32 %v1542, %v1548
        %v1552 = vpack.c.bf16 %v1551, %v1550
        %v1553 = vld [vmem:[#allocation15] sm:$0xff]
        %v1554 = vld [vmem:[#allocation15 + $0x8] sm:$0xff]
        %v1555 = vld [vmem:[#allocation15 + $0x10] sm:$0xff]
        %v1556 = vld [vmem:[#allocation15 + $0x18] sm:$0xff]
        %v1557 = vld [vmem:[#allocation15 + $0x20] sm:$0xff]
        %v1558 = vld [vmem:[#allocation15 + $0x28] sm:$0xff]
        %v1559 = vld [vmem:[#allocation15 + $0x30] sm:$0xff]
        %v1560 = vld [vmem:[#allocation15 + $0x38] sm:$0xff]
        %v1561 = vld [vmem:[#allocation15 + $0x40] sm:$0xff]
        %v1562 = vld [vmem:[#allocation15 + $0x48] sm:$0xff]
        %v1563 = vld [vmem:[#allocation15 + $0x50] sm:$0xff]
        %v1564 = vld [vmem:[#allocation15 + $0x58] sm:$0xff]
        %v1565 = vld [vmem:[#allocation15 + $0x60] sm:$0xff]
        %v1566 = vld [vmem:[#allocation15 + $0x68] sm:$0xff]
        %v1567 = vld [vmem:[#allocation15 + $0x70] sm:$0xff]
        %v1568 = vld [vmem:[#allocation15 + $0x78] sm:$0xff]
        %v1569 = vld [vmem:[#allocation15 + $0x80] sm:$0xff]
        %v1570 = vld [vmem:[#allocation15 + $0x88] sm:$0xff]
        %v1571 = vld [vmem:[#allocation15 + $0x90] sm:$0xff]
        %v1572 = vld [vmem:[#allocation15 + $0x98] sm:$0xff]
        %v1573 = vld [vmem:[#allocation15 + $0xa0] sm:$0xff]
        %v1574 = vld [vmem:[#allocation15 + $0xa8] sm:$0xff]
        %v1575 = vld [vmem:[#allocation15 + $0xb0] sm:$0xff]
        %v1576 = vld [vmem:[#allocation15 + $0xb8] sm:$0xff]
        %v1577 = vld [vmem:[#allocation15 + $0xc0] sm:$0xff]
        %v1578 = vld [vmem:[#allocation15 + $0xc8] sm:$0xff]
        %v1579 = vld [vmem:[#allocation15 + $0xd0] sm:$0xff]
        %v1580 = vld [vmem:[#allocation15 + $0xd8] sm:$0xff]
        %v1581 = vld [vmem:[#allocation15 + $0xe0] sm:$0xff]
        %v1582 = vld [vmem:[#allocation15 + $0xe8] sm:$0xff]
        %v1583 = vld [vmem:[#allocation15 + $0xf0] sm:$0xff]
        %v1584 = vld [vmem:[#allocation15 + $0xf8] sm:$0xff]
        %v1585 = vld [vmem:[%s10] sm:$0xf]
        %v1587 = vlaneseq
        %v1588 = vshrl.u32 %v1587, 7
        %v1589 = vsub.s32 0, %v1588
        %v1590 = vrot.slane %v1585, %v1589
        %v1591 = vlaneseq
        %v1592 = vshrl.u32 %v1591, 7
        %v1593 = vsub.s32 1, %v1592
        %v1594 = vrot.slane %v1585, %v1593
        %v1595 = vlaneseq
        %v1596 = vshrl.u32 %v1595, 7
        %v1597 = vsub.s32 2, %v1596
        %v1598 = vrot.slane %v1585, %v1597
        %v1599 = vlaneseq
        %v1600 = vshrl.u32 %v1599, 7
        %v1601 = vsub.s32 3, %v1600
        %v1602 = vrot.slane %v1585, %v1601
        %v1639 = vunpack.c.l.b16 %v1553
        %v1640 = vunpack.c.h.b16 %v1553
        %v1641 = vunpack.c.l.b16 %v1554
        %v1642 = vunpack.c.h.b16 %v1554
        %v1643 = vunpack.c.l.b16 %v1555
        %v1644 = vunpack.c.h.b16 %v1555
        %v1645 = vunpack.c.l.b16 %v1556
        %v1646 = vunpack.c.h.b16 %v1556
        %v1647 = vunpack.c.l.b16 %v1557
        %v1648 = vunpack.c.h.b16 %v1557
        %v1649 = vunpack.c.l.b16 %v1558
        %v1650 = vunpack.c.h.b16 %v1558
        %v1651 = vunpack.c.l.b16 %v1559
        %v1652 = vunpack.c.h.b16 %v1559
        %v1653 = vunpack.c.l.b16 %v1560
        %v1654 = vunpack.c.h.b16 %v1560
        %v1655 = vunpack.c.l.b16 %v1561
        %v1656 = vunpack.c.h.b16 %v1561
        %v1657 = vunpack.c.l.b16 %v1562
        %v1658 = vunpack.c.h.b16 %v1562
        %v1659 = vunpack.c.l.b16 %v1563
        %v1660 = vunpack.c.h.b16 %v1563
        %v1661 = vunpack.c.l.b16 %v1564
        %v1662 = vunpack.c.h.b16 %v1564
        %v1663 = vunpack.c.l.b16 %v1565
        %v1664 = vunpack.c.h.b16 %v1565
        %v1665 = vunpack.c.l.b16 %v1566
        %v1666 = vunpack.c.h.b16 %v1566
        %v1667 = vunpack.c.l.b16 %v1567
        %v1668 = vunpack.c.h.b16 %v1567
        %v1669 = vunpack.c.l.b16 %v1568
        %v1670 = vunpack.c.h.b16 %v1568
        %v1671 = vunpack.c.l.b16 %v1569
        %v1672 = vunpack.c.h.b16 %v1569
        %v1673 = vunpack.c.l.b16 %v1570
        %v1674 = vunpack.c.h.b16 %v1570
        %v1675 = vunpack.c.l.b16 %v1571
        %v1676 = vunpack.c.h.b16 %v1571
        %v1677 = vunpack.c.l.b16 %v1572
        %v1678 = vunpack.c.h.b16 %v1572
        %v1679 = vunpack.c.l.b16 %v1573
        %v1680 = vunpack.c.h.b16 %v1573
        %v1681 = vunpack.c.l.b16 %v1574
        %v1682 = vunpack.c.h.b16 %v1574
        %v1683 = vunpack.c.l.b16 %v1575
        %v1684 = vunpack.c.h.b16 %v1575
        %v1685 = vunpack.c.l.b16 %v1576
        %v1686 = vunpack.c.h.b16 %v1576
        %v1687 = vunpack.c.l.b16 %v1577
        %v1688 = vunpack.c.h.b16 %v1577
        %v1689 = vunpack.c.l.b16 %v1578
        %v1690 = vunpack.c.h.b16 %v1578
        %v1691 = vunpack.c.l.b16 %v1579
        %v1692 = vunpack.c.h.b16 %v1579
        %v1693 = vunpack.c.l.b16 %v1580
        %v1694 = vunpack.c.h.b16 %v1580
        %v1695 = vunpack.c.l.b16 %v1581
        %v1696 = vunpack.c.h.b16 %v1581
        %v1697 = vunpack.c.l.b16 %v1582
        %v1698 = vunpack.c.h.b16 %v1582
        %v1699 = vunpack.c.l.b16 %v1583
        %v1700 = vunpack.c.h.b16 %v1583
        %v1701 = vunpack.c.l.b16 %v1584
        %v1702 = vunpack.c.h.b16 %v1584
        %v1703 = vpack.c.b16 %v1643, %v1639
        %v1704 = vpack.c.b16 %v1644, %v1640
        %v1705 = vpack.c.b16 %v1645, %v1641
        %v1706 = vpack.c.b16 %v1646, %v1642
        %v1707 = vpack.c.b16 %v1651, %v1647
        %v1708 = vpack.c.b16 %v1652, %v1648
        %v1709 = vpack.c.b16 %v1653, %v1649
        %v1710 = vpack.c.b16 %v1654, %v1650
        %v1711 = vpack.c.b16 %v1659, %v1655
        %v1712 = vpack.c.b16 %v1660, %v1656
        %v1713 = vpack.c.b16 %v1661, %v1657
        %v1714 = vpack.c.b16 %v1662, %v1658
        %v1715 = vpack.c.b16 %v1667, %v1663
        %v1716 = vpack.c.b16 %v1668, %v1664
        %v1717 = vpack.c.b16 %v1669, %v1665
        %v1718 = vpack.c.b16 %v1670, %v1666
        %v1719 = vpack.c.b16 %v1675, %v1671
        %v1720 = vpack.c.b16 %v1676, %v1672
        %v1721 = vpack.c.b16 %v1677, %v1673
        %v1722 = vpack.c.b16 %v1678, %v1674
        %v1723 = vpack.c.b16 %v1683, %v1679
        %v1724 = vpack.c.b16 %v1684, %v1680
        %v1725 = vpack.c.b16 %v1685, %v1681
        %v1726 = vpack.c.b16 %v1686, %v1682
        %v1727 = vpack.c.b16 %v1691, %v1687
        %v1728 = vpack.c.b16 %v1692, %v1688
        %v1729 = vpack.c.b16 %v1693, %v1689
        %v1730 = vpack.c.b16 %v1694, %v1690
        %v1731 = vpack.c.b16 %v1699, %v1695
        %v1732 = vpack.c.b16 %v1700, %v1696
        %v1733 = vpack.c.b16 %v1701, %v1697
        %v1734 = vpack.c.b16 %v1702, %v1698
        %1767 = vmatprep.subr.bf16.mxu0 %v1704
        %1768 = vmatpush1.bf16.msra.mxu0 %v1703
        %1769 = vmatprep.subr.bf16.mxu0 %v1708
        %1770 = vmatpush1.bf16.msra.mxu0 %v1707
        %1771 = vmatprep.subr.bf16.mxu0 %v1712
        %1772 = vmatpush1.bf16.msra.mxu0 %v1711
        %1773 = vmatprep.subr.bf16.mxu0 %v1716
        %1774 = vmatpush1.bf16.msra.mxu0 %v1715
        %1775 = vmatprep.subr.bf16.mxu0 %v1720
        %1776 = vmatpush1.bf16.msra.mxu0 %v1719
        %1777 = vmatprep.subr.bf16.mxu0 %v1724
        %1778 = vmatpush1.bf16.msra.mxu0 %v1723
        %1779 = vmatprep.subr.bf16.mxu0 %v1728
        %1780 = vmatpush1.bf16.msra.mxu0 %v1727
        %1781 = vmatprep.subr.bf16.mxu0 %v1732
        %1782 = vmatpush1.bf16.msra.mxu0 %v1731
        %1783 = vmatprep.subr.bf16.mxu0 0
        %1784 = vmatpush1.bf16.msra.mxu0 0
        %1785 = vmatprep.subr.bf16.mxu0 0
        %1786 = vmatpush1.bf16.msra.mxu0 0
        %1787 = vmatprep.subr.bf16.mxu0 0
        %1788 = vmatpush1.bf16.msra.mxu0 0
        %1789 = vmatprep.subr.bf16.mxu0 0
        %1790 = vmatpush1.bf16.msra.mxu0 0
        %1791 = vmatprep.subr.bf16.mxu0 0
        %1792 = vmatpush1.bf16.msra.mxu0 0
        %1793 = vmatprep.subr.bf16.mxu0 0
        %1794 = vmatpush1.bf16.msra.mxu0 0
        %1795 = vmatprep.subr.bf16.mxu0 0
        %1796 = vmatpush1.bf16.msra.mxu0 0
        %1797 = vmatprep.subr.bf16.mxu0 0
        %1798 = vmatpush1.bf16.msra.mxu0 0
        %1799 = vmatprep.mubr.bf16.mxu0 0
        %1800 = vmatmul.mubr.bf16.gmra.mrb[0].mxu0 %v1552
        %v1801 = vpop.f32.mrb[0].mxu0
        %v1802 = vadd.f32 %v1590, %v1801
        %v1803 = vpop.f32.mrb[0].mxu0
        %v1804 = vadd.f32 %v1594, %v1803
        %v1805 = vpop.f32.mrb[0].mxu0
        %v1806 = vadd.f32 %v1590, %v1805
        %v1807 = vpop.f32.mrb[0].mxu0
        %v1808 = vadd.f32 %v1594, %v1807
        %1809 = vdwg.mxu0
        %1810 = vmatprep.subr.bf16.mxu0 %v1706
        %1811 = vmatpush1.bf16.msra.mxu0 %v1705
        %1812 = vmatprep.subr.bf16.mxu0 %v1710
        %1813 = vmatpush1.bf16.msra.mxu0 %v1709
        %1814 = vmatprep.subr.bf16.mxu0 %v1714
        %1815 = vmatpush1.bf16.msra.mxu0 %v1713
        %1816 = vmatprep.subr.bf16.mxu0 %v1718
        %1817 = vmatpush1.bf16.msra.mxu0 %v1717
        %1818 = vmatprep.subr.bf16.mxu0 %v1722
        %1819 = vmatpush1.bf16.msra.mxu0 %v1721
        %1820 = vmatprep.subr.bf16.mxu0 %v1726
        %1821 = vmatpush1.bf16.msra.mxu0 %v1725
        %1822 = vmatprep.subr.bf16.mxu0 %v1730
        %1823 = vmatpush1.bf16.msra.mxu0 %v1729
        %1824 = vmatprep.subr.bf16.mxu0 %v1734
        %1825 = vmatpush1.bf16.msra.mxu0 %v1733
        %1826 = vmatprep.subr.bf16.mxu0 0
        %1827 = vmatpush1.bf16.msra.mxu0 0
        %1828 = vmatprep.subr.bf16.mxu0 0
        %1829 = vmatpush1.bf16.msra.mxu0 0
        %1830 = vmatprep.subr.bf16.mxu0 0
        %1831 = vmatpush1.bf16.msra.mxu0 0
        %1832 = vmatprep.subr.bf16.mxu0 0
        %1833 = vmatpush1.bf16.msra.mxu0 0
        %1834 = vmatprep.subr.bf16.mxu0 0
        %1835 = vmatpush1.bf16.msra.mxu0 0
        %1836 = vmatprep.subr.bf16.mxu0 0
        %1837 = vmatpush1.bf16.msra.mxu0 0
        %1838 = vmatprep.subr.bf16.mxu0 0
        %1839 = vmatpush1.bf16.msra.mxu0 0
        %1840 = vmatprep.subr.bf16.mxu0 0
        %1841 = vmatpush1.bf16.msra.mxu0 0
        %1842 = vmatprep.mubr.bf16.mxu0 0
        %1843 = vmatmul.mubr.bf16.gmra.mrb[0].mxu0 %v1552
        %v1844 = vpop.f32.mrb[0].mxu0
        %v1845 = vadd.f32 %v1598, %v1844
        %v1846 = vpop.f32.mrb[0].mxu0
        %v1847 = vadd.f32 %v1602, %v1846
        %v1848 = vpop.f32.mrb[0].mxu0
        %v1849 = vadd.f32 %v1598, %v1848
        %v1850 = vpop.f32.mrb[0].mxu0
        %v1851 = vadd.f32 %v1602, %v1850
        %1852 = vdwg.mxu0
        %v1853 = vmul.f32 %v1802, 1.702
        %v1854 = vmul.f32 %v1804, 1.702
        %v1855 = vmul.f32 %v1845, 1.702
        %v1856 = vmul.f32 %v1847, 1.702
        %v1857 = vmul.f32 %v1806, 1.702
        %v1858 = vmul.f32 %v1808, 1.702
        %v1859 = vmul.f32 %v1849, 1.702
        %v1860 = vmul.f32 %v1851, 1.702
        %v1861 = vxor.u32 %v1853, 2147483648
        %v1862 = vxor.u32 %v1854, 2147483648
        %v1863 = vxor.u32 %v1855, 2147483648
        %v1864 = vxor.u32 %v1856, 2147483648
        %v1865 = vxor.u32 %v1857, 2147483648
        %v1866 = vxor.u32 %v1858, 2147483648
        %v1867 = vxor.u32 %v1859, 2147483648
        %v1868 = vxor.u32 %v1860, 2147483648
        %v1869 = vmul.f32 %v1861, 1.442695
        %v1870 = vpow.pop %v1869
        %v1871 = vmul.f32 %v1862, 1.442695
        %v1872 = vpow.pop %v1871
        %v1873 = vmul.f32 %v1863, 1.442695
        %v1874 = vpow.pop %v1873
        %v1875 = vmul.f32 %v1864, 1.442695
        %v1876 = vpow.pop %v1875
        %v1877 = vmul.f32 %v1865, 1.442695
        %v1878 = vpow.pop %v1877
        %v1879 = vmul.f32 %v1866, 1.442695
        %v1880 = vpow.pop %v1879
        %v1881 = vmul.f32 %v1867, 1.442695
        %v1882 = vpow.pop %v1881
        %v1883 = vmul.f32 %v1868, 1.442695
        %v1884 = vpow.pop %v1883
        %v1885 = vadd.f32 %v1870, 1.0
        %v1886 = vadd.f32 %v1872, 1.0
        %v1887 = vadd.f32 %v1874, 1.0
        %v1888 = vadd.f32 %v1876, 1.0
        %v1889 = vadd.f32 %v1878, 1.0
        %v1890 = vadd.f32 %v1880, 1.0
        %v1891 = vadd.f32 %v1882, 1.0
        %v1892 = vadd.f32 %v1884, 1.0
        %v1893 = vrcp.pop %v1885
        %v1894 = vmul.f32 1.0, %v1893
        %v1895 = vrcp.pop %v1886
        %v1896 = vmul.f32 1.0, %v1895
        %v1897 = vrcp.pop %v1887
        %v1898 = vmul.f32 1.0, %v1897
        %v1899 = vrcp.pop %v1888
        %v1900 = vmul.f32 1.0, %v1899
        %v1901 = vrcp.pop %v1889
        %v1902 = vmul.f32 1.0, %v1901
        %v1903 = vrcp.pop %v1890
        %v1904 = vmul.f32 1.0, %v1903
        %v1905 = vrcp.pop %v1891
        %v1906 = vmul.f32 1.0, %v1905
        %v1907 = vrcp.pop %v1892
        %v1908 = vmul.f32 1.0, %v1907
        %v1909 = vmul.f32 %v1802, %v1894
        %v1910 = vmul.f32 %v1804, %v1896
        %v1911 = vmul.f32 %v1845, %v1898
        %v1912 = vmul.f32 %v1847, %v1900
        %v1913 = vmul.f32 %v1806, %v1902
        %v1914 = vmul.f32 %v1808, %v1904
        %v1915 = vmul.f32 %v1849, %v1906
        %v1916 = vmul.f32 %v1851, %v1908
        %v1917 = vpack.c.bf16 %v1913, %v1909
        %v1918 = vpack.c.bf16 %v1914, %v1910
        %v1919 = vpack.c.bf16 %v1915, %v1911
        %v1920 = vpack.c.bf16 %v1916, %v1912
        %v1921 = vld [vmem:[#allocation17] sm:$0xf]
        %v1922 = vld [vmem:[#allocation17 + $0x4] sm:$0xf]
        %v1923 = vld [vmem:[#allocation17 + $0x8] sm:$0xf]
        %v1924 = vld [vmem:[#allocation17 + $0xc] sm:$0xf]
        %v1925 = vld [vmem:[#allocation17 + $0x10] sm:$0xf]
        %v1926 = vld [vmem:[#allocation17 + $0x14] sm:$0xf]
        %v1927 = vld [vmem:[#allocation17 + $0x18] sm:$0xf]
        %v1928 = vld [vmem:[#allocation17 + $0x1c] sm:$0xf]
        %v1929 = vld [vmem:[#allocation17 + $0x20] sm:$0xf]
        %v1930 = vld [vmem:[#allocation17 + $0x24] sm:$0xf]
        %v1931 = vld [vmem:[#allocation17 + $0x28] sm:$0xf]
        %v1932 = vld [vmem:[#allocation17 + $0x2c] sm:$0xf]
        %v1933 = vld [vmem:[#allocation17 + $0x30] sm:$0xf]
        %v1934 = vld [vmem:[#allocation17 + $0x34] sm:$0xf]
        %v1935 = vld [vmem:[#allocation17 + $0x38] sm:$0xf]
        %v1936 = vld [vmem:[#allocation17 + $0x3c] sm:$0xf]
        %v1937 = vld [vmem:[#allocation17 + $0x40] sm:$0xf]
        %v1938 = vld [vmem:[#allocation17 + $0x44] sm:$0xf]
        %v1939 = vld [vmem:[#allocation17 + $0x48] sm:$0xf]
        %v1940 = vld [vmem:[#allocation17 + $0x4c] sm:$0xf]
        %v1941 = vld [vmem:[#allocation17 + $0x50] sm:$0xf]
        %v1942 = vld [vmem:[#allocation17 + $0x54] sm:$0xf]
        %v1943 = vld [vmem:[#allocation17 + $0x58] sm:$0xf]
        %v1944 = vld [vmem:[#allocation17 + $0x5c] sm:$0xf]
        %v1945 = vld [vmem:[#allocation17 + $0x60] sm:$0xf]
        %v1946 = vld [vmem:[#allocation17 + $0x64] sm:$0xf]
        %v1947 = vld [vmem:[#allocation17 + $0x68] sm:$0xf]
        %v1948 = vld [vmem:[#allocation17 + $0x6c] sm:$0xf]
        %v1949 = vld [vmem:[#allocation17 + $0x70] sm:$0xf]
        %v1950 = vld [vmem:[#allocation17 + $0x74] sm:$0xf]
        %v1951 = vld [vmem:[#allocation17 + $0x78] sm:$0xf]
        %v1952 = vld [vmem:[#allocation17 + $0x7c] sm:$0xf]
        %v1953 = vld [vmem:[#allocation17 + $0x80] sm:$0xf]
        %v1954 = vld [vmem:[#allocation17 + $0x84] sm:$0xf]
        %v1955 = vld [vmem:[#allocation17 + $0x88] sm:$0xf]
        %v1956 = vld [vmem:[#allocation17 + $0x8c] sm:$0xf]
        %v1957 = vld [vmem:[#allocation17 + $0x90] sm:$0xf]
        %v1958 = vld [vmem:[#allocation17 + $0x94] sm:$0xf]
        %v1959 = vld [vmem:[#allocation17 + $0x98] sm:$0xf]
        %v1960 = vld [vmem:[#allocation17 + $0x9c] sm:$0xf]
        %v1961 = vld [vmem:[#allocation17 + $0xa0] sm:$0xf]
        %v1962 = vld [vmem:[#allocation17 + $0xa4] sm:$0xf]
        %v1963 = vld [vmem:[#allocation17 + $0xa8] sm:$0xf]
        %v1964 = vld [vmem:[#allocation17 + $0xac] sm:$0xf]
        %v1965 = vld [vmem:[#allocation17 + $0xb0] sm:$0xf]
        %v1966 = vld [vmem:[#allocation17 + $0xb4] sm:$0xf]
        %v1967 = vld [vmem:[#allocation17 + $0xb8] sm:$0xf]
        %v1968 = vld [vmem:[#allocation17 + $0xbc] sm:$0xf]
        %v1969 = vld [vmem:[#allocation17 + $0xc0] sm:$0xf]
        %v1970 = vld [vmem:[#allocation17 + $0xc4] sm:$0xf]
        %v1971 = vld [vmem:[#allocation17 + $0xc8] sm:$0xf]
        %v1972 = vld [vmem:[#allocation17 + $0xcc] sm:$0xf]
        %v1973 = vld [vmem:[#allocation17 + $0xd0] sm:$0xf]
        %v1974 = vld [vmem:[#allocation17 + $0xd4] sm:$0xf]
        %v1975 = vld [vmem:[#allocation17 + $0xd8] sm:$0xf]
        %v1976 = vld [vmem:[#allocation17 + $0xdc] sm:$0xf]
        %v1977 = vld [vmem:[#allocation17 + $0xe0] sm:$0xf]
        %v1978 = vld [vmem:[#allocation17 + $0xe4] sm:$0xf]
        %v1979 = vld [vmem:[#allocation17 + $0xe8] sm:$0xf]
        %v1980 = vld [vmem:[#allocation17 + $0xec] sm:$0xf]
        %v1981 = vld [vmem:[#allocation17 + $0xf0] sm:$0xf]
        %v1982 = vld [vmem:[#allocation17 + $0xf4] sm:$0xf]
        %v1983 = vld [vmem:[#allocation17 + $0xf8] sm:$0xf]
        %v1984 = vld [vmem:[#allocation17 + $0xfc] sm:$0xf]
        %v2049 = vunpack.c.l.b16 %v1921
        %v2050 = vunpack.c.l.b16 %v1922
        %v2051 = vunpack.c.l.b16 %v1923
        %v2052 = vunpack.c.l.b16 %v1924
        %v2053 = vunpack.c.l.b16 %v1925
        %v2054 = vunpack.c.l.b16 %v1926
        %v2055 = vunpack.c.l.b16 %v1927
        %v2056 = vunpack.c.l.b16 %v1928
        %v2057 = vunpack.c.l.b16 %v1929
        %v2058 = vunpack.c.l.b16 %v1930
        %v2059 = vunpack.c.l.b16 %v1931
        %v2060 = vunpack.c.l.b16 %v1932
        %v2061 = vunpack.c.l.b16 %v1933
        %v2062 = vunpack.c.l.b16 %v1934
        %v2063 = vunpack.c.l.b16 %v1935
        %v2064 = vunpack.c.l.b16 %v1936
        %v2065 = vunpack.c.l.b16 %v1937
        %v2066 = vunpack.c.l.b16 %v1938
        %v2067 = vunpack.c.l.b16 %v1939
        %v2068 = vunpack.c.l.b16 %v1940
        %v2069 = vunpack.c.l.b16 %v1941
        %v2070 = vunpack.c.l.b16 %v1942
        %v2071 = vunpack.c.l.b16 %v1943
        %v2072 = vunpack.c.l.b16 %v1944
        %v2073 = vunpack.c.l.b16 %v1945
        %v2074 = vunpack.c.l.b16 %v1946
        %v2075 = vunpack.c.l.b16 %v1947
        %v2076 = vunpack.c.l.b16 %v1948
        %v2077 = vunpack.c.l.b16 %v1949
        %v2078 = vunpack.c.l.b16 %v1950
        %v2079 = vunpack.c.l.b16 %v1951
        %v2080 = vunpack.c.l.b16 %v1952
        %v2081 = vunpack.c.l.b16 %v1953
        %v2082 = vunpack.c.l.b16 %v1954
        %v2083 = vunpack.c.l.b16 %v1955
        %v2084 = vunpack.c.l.b16 %v1956
        %v2085 = vunpack.c.l.b16 %v1957
        %v2086 = vunpack.c.l.b16 %v1958
        %v2087 = vunpack.c.l.b16 %v1959
        %v2088 = vunpack.c.l.b16 %v1960
        %v2089 = vunpack.c.l.b16 %v1961
        %v2090 = vunpack.c.l.b16 %v1962
        %v2091 = vunpack.c.l.b16 %v1963
        %v2092 = vunpack.c.l.b16 %v1964
        %v2093 = vunpack.c.l.b16 %v1965
        %v2094 = vunpack.c.l.b16 %v1966
        %v2095 = vunpack.c.l.b16 %v1967
        %v2096 = vunpack.c.l.b16 %v1968
        %v2097 = vunpack.c.l.b16 %v1969
        %v2098 = vunpack.c.l.b16 %v1970
        %v2099 = vunpack.c.l.b16 %v1971
        %v2100 = vunpack.c.l.b16 %v1972
        %v2101 = vunpack.c.l.b16 %v1973
        %v2102 = vunpack.c.l.b16 %v1974
        %v2103 = vunpack.c.l.b16 %v1975
        %v2104 = vunpack.c.l.b16 %v1976
        %v2105 = vunpack.c.l.b16 %v1977
        %v2106 = vunpack.c.l.b16 %v1978
        %v2107 = vunpack.c.l.b16 %v1979
        %v2108 = vunpack.c.l.b16 %v1980
        %v2109 = vunpack.c.l.b16 %v1981
        %v2110 = vunpack.c.l.b16 %v1982
        %v2111 = vunpack.c.l.b16 %v1983
        %v2112 = vunpack.c.l.b16 %v1984
        %v2113 = vpack.c.b16 %v2050, %v2049
        %v2114 = vpack.c.b16 %v2052, %v2051
        %v2115 = vpack.c.b16 %v2054, %v2053
        %v2116 = vpack.c.b16 %v2056, %v2055
        %v2117 = vpack.c.b16 %v2058, %v2057
        %v2118 = vpack.c.b16 %v2060, %v2059
        %v2119 = vpack.c.b16 %v2062, %v2061
        %v2120 = vpack.c.b16 %v2064, %v2063
        %v2121 = vpack.c.b16 %v2066, %v2065
        %v2122 = vpack.c.b16 %v2068, %v2067
        %v2123 = vpack.c.b16 %v2070, %v2069
        %v2124 = vpack.c.b16 %v2072, %v2071
        %v2125 = vpack.c.b16 %v2074, %v2073
        %v2126 = vpack.c.b16 %v2076, %v2075
        %v2127 = vpack.c.b16 %v2078, %v2077
        %v2128 = vpack.c.b16 %v2080, %v2079
        %v2129 = vpack.c.b16 %v2082, %v2081
        %v2130 = vpack.c.b16 %v2084, %v2083
        %v2131 = vpack.c.b16 %v2086, %v2085
        %v2132 = vpack.c.b16 %v2088, %v2087
        %v2133 = vpack.c.b16 %v2090, %v2089
        %v2134 = vpack.c.b16 %v2092, %v2091
        %v2135 = vpack.c.b16 %v2094, %v2093
        %v2136 = vpack.c.b16 %v2096, %v2095
        %v2137 = vpack.c.b16 %v2098, %v2097
        %v2138 = vpack.c.b16 %v2100, %v2099
        %v2139 = vpack.c.b16 %v2102, %v2101
        %v2140 = vpack.c.b16 %v2104, %v2103
        %v2141 = vpack.c.b16 %v2106, %v2105
        %v2142 = vpack.c.b16 %v2108, %v2107
        %v2143 = vpack.c.b16 %v2110, %v2109
        %v2144 = vpack.c.b16 %v2112, %v2111
        %2177 = vmatprep.subr.bf16.mxu0 0
        %2178 = vmatpush1.bf16.msra.mxu0 %v2113
        %2179 = vmatprep.subr.bf16.mxu0 0
        %2180 = vmatpush1.bf16.msra.mxu0 %v2114
        %2181 = vmatprep.subr.bf16.mxu0 0
        %2182 = vmatpush1.bf16.msra.mxu0 %v2115
        %2183 = vmatprep.subr.bf16.mxu0 0
        %2184 = vmatpush1.bf16.msra.mxu0 %v2116
        %2185 = vmatprep.subr.bf16.mxu0 0
        %2186 = vmatpush1.bf16.msra.mxu0 %v2117
        %2187 = vmatprep.subr.bf16.mxu0 0
        %2188 = vmatpush1.bf16.msra.mxu0 %v2118
        %2189 = vmatprep.subr.bf16.mxu0 0
        %2190 = vmatpush1.bf16.msra.mxu0 %v2119
        %2191 = vmatprep.subr.bf16.mxu0 0
        %2192 = vmatpush1.bf16.msra.mxu0 %v2120
        %2193 = vmatprep.subr.bf16.mxu0 0
        %2194 = vmatpush1.bf16.msra.mxu0 %v2121
        %2195 = vmatprep.subr.bf16.mxu0 0
        %2196 = vmatpush1.bf16.msra.mxu0 %v2122
        %2197 = vmatprep.subr.bf16.mxu0 0
        %2198 = vmatpush1.bf16.msra.mxu0 %v2123
        %2199 = vmatprep.subr.bf16.mxu0 0
        %2200 = vmatpush1.bf16.msra.mxu0 %v2124
        %2201 = vmatprep.subr.bf16.mxu0 0
        %2202 = vmatpush1.bf16.msra.mxu0 %v2125
        %2203 = vmatprep.subr.bf16.mxu0 0
        %2204 = vmatpush1.bf16.msra.mxu0 %v2126
        %2205 = vmatprep.subr.bf16.mxu0 0
        %2206 = vmatpush1.bf16.msra.mxu0 %v2127
        %2207 = vmatprep.subr.bf16.mxu0 0
        %2208 = vmatpush1.bf16.msra.mxu0 %v2128
        %2209 = vmatprep.mubr.bf16.mxu0 %v1918
        %2210 = vmatmul.mubr.bf16.gmra.mrb[0].mxu0 %v1917
        %v2211 = vpop.f32.mrb[0].mxu0
        %v2212 = vadd.f32 0.0, %v2211
        %v2213 = vpop.f32.mrb[0].mxu0
        %v2214 = vpop.f32.mrb[0].mxu0
        %v2215 = vadd.f32 0.0, %v2214
        %v2216 = vpop.f32.mrb[0].mxu0
        %2217 = vdwg.mxu0
        %2218 = vmatprep.subr.bf16.mxu0 0
        %2219 = vmatpush1.bf16.msra.mxu0 %v2129
        %2220 = vmatprep.subr.bf16.mxu0 0
        %2221 = vmatpush1.bf16.msra.mxu0 %v2130
        %2222 = vmatprep.subr.bf16.mxu0 0
        %2223 = vmatpush1.bf16.msra.mxu0 %v2131
        %2224 = vmatprep.subr.bf16.mxu0 0
        %2225 = vmatpush1.bf16.msra.mxu0 %v2132
        %2226 = vmatprep.subr.bf16.mxu0 0
        %2227 = vmatpush1.bf16.msra.mxu0 %v2133
        %2228 = vmatprep.subr.bf16.mxu0 0
        %2229 = vmatpush1.bf16.msra.mxu0 %v2134
        %2230 = vmatprep.subr.bf16.mxu0 0
        %2231 = vmatpush1.bf16.msra.mxu0 %v2135
        %2232 = vmatprep.subr.bf16.mxu0 0
        %2233 = vmatpush1.bf16.msra.mxu0 %v2136
        %2234 = vmatprep.subr.bf16.mxu0 0
        %2235 = vmatpush1.bf16.msra.mxu0 %v2137
        %2236 = vmatprep.subr.bf16.mxu0 0
        %2237 = vmatpush1.bf16.msra.mxu0 %v2138
        %2238 = vmatprep.subr.bf16.mxu0 0
        %2239 = vmatpush1.bf16.msra.mxu0 %v2139
        %2240 = vmatprep.subr.bf16.mxu0 0
        %2241 = vmatpush1.bf16.msra.mxu0 %v2140
        %2242 = vmatprep.subr.bf16.mxu0 0
        %2243 = vmatpush1.bf16.msra.mxu0 %v2141
        %2244 = vmatprep.subr.bf16.mxu0 0
        %2245 = vmatpush1.bf16.msra.mxu0 %v2142
        %2246 = vmatprep.subr.bf16.mxu0 0
        %2247 = vmatpush1.bf16.msra.mxu0 %v2143
        %2248 = vmatprep.subr.bf16.mxu0 0
        %2249 = vmatpush1.bf16.msra.mxu0 %v2144
        %2250 = vmatprep.mubr.bf16.mxu0 %v1920
        %2251 = vmatmul.mubr.bf16.gmra.mrb[0].mxu0 %v1919
        %v2252 = vpop.f32.mrb[0].mxu0
        %v2253 = vadd.f32 %v2212, %v2252
        %v2254 = vpop.f32.mrb[0].mxu0
        %v2255 = vpop.f32.mrb[0].mxu0
        %v2256 = vadd.f32 %v2215, %v2255
        %v2257 = vpop.f32.mrb[0].mxu0
        %2258 = vdwg.mxu0
        %v2259 = vadd.f32 %v1510, %v2253
        %v2260 = vadd.f32 %v1511, %v2256
        %v2261 = vld [vmem:[%s12] sm:$0x1]
        %v2263 = vlaneseq
        %v2264 = vshrl.u32 %v2263, 7
        %v2265 = vsub.s32 0, %v2264
        %v2266 = vrot.slane %v2261, %v2265
        %v2268 = vadd.f32 %v2259, %v2266
        %v2269 = vadd.f32 %v2260, %v2266
        %2270 = vst [vmem:[%s541] sm:$0xff] %v2268
        %2271 = vst [vmem:[%s541 + $0x8] sm:$0xff] %v2269
        %s2272 = sand.u32 %s319, 1
        %s2273 = scalar_lea.sflag [#allocation8], %s2272
        %s2274 = sand.u32 %s319, 1
        %s2275 = smul.addr %s2274, 16
        %s2276 = scalar_lea.vmem [#allocation18], %s2275
        // Predicated region
        $region101: #{tpu_custom_call.1} parent=71 // pred_check
          %p2277 = pneg %p329
        $region102: #{tpu_custom_call.1} parent=71 // pred_check_branch
          %2279 = sbr.rel (%p2277) target = $region104
        $region103: #{tpu_custom_call.1} parent=71 // pred_region
          %s2281 = ssub.s32 256, 256
          %2282 = vsyncadd %s2273, %s2281
          %s2283 = smul.addr %s33, 2
          %s2284 = smul.addr %s2283, 128
          %s2285 = scalar_lea.hbm %s13, %s2284
          %s2286 = sshll.u32 %s2276, 4
          %s2287 = int_to_ptr.vmem [resolvable:$true] %s2286
          %2292 = dma.vmem_to_hbm [thread:$0]  %s2287, 256, %s2285, %s2273, 128, 128, 8
        $region104: #{tpu_custom_call.1} parent=71 // pred_fallthru
          _
      $region72: #{tpu_custom_call.1} parent=5 // pred_fallthru
        _
      %p2293 = scmp.le.s32.totalorder 2, %s28
      // Predicated region
      $region105: #{tpu_custom_call.1} parent=5 // pred_check
        %p2294 = pneg %p2293
      $region106: #{tpu_custom_call.1} parent=5 // pred_check_branch
        %2296 = sbr.rel (%p2294) target = $region108
      $region107: #{tpu_custom_call.1} parent=5 // pred_region
        %s2297 = ssub.s32 %s28, 2
        // Predicated region
        $region109: #{tpu_custom_call.1} parent=107 // pred_check
          %p2298 = pneg %p335
        $region110: #{tpu_custom_call.1} parent=107 // pred_check_branch
          %2300 = sbr.rel (%p2298) target = $region112
        $region111: #{tpu_custom_call.1} parent=107 // pred_region
          %s2301 = sand.u32 %s320, 1
          %s2302 = scalar_lea.sflag [#allocation8], %s2301
          %s2303 = sand.u32 %s320, 1
          %s2304 = smul.addr %s2303, 16
          %s2305 = scalar_lea.vmem [#allocation18], %s2304
          %2306 = dma.done %s2302, 256
        $region112: #{tpu_custom_call.1} parent=107 // pred_fallthru
          _
      $region108: #{tpu_custom_call.1} parent=5 // pred_fallthru
        _
    $region6: #{tpu_custom_call.1} parent=1 // loop_footer
      %s32 = sadd.s32 1, %s28
    $region7: #{tpu_custom_call.1} parent=1 // loop_footer_branch
      %27 = sbr.rel target = $region3
    $region8: #{tpu_custom_call.1} parent=1 // loop_exit
      _
    %2307 = vsyncpa [#allocation7], 1
    %s2308 = scalar_lea.sflag [#allocation7], 1
    %2309 = vsyncpa %s2308, 1
    %2310 = vsyncpa [#allocation10], 1
    %2311 = vsyncpa [#allocation13], 1
    %2312 = vsyncpa [#allocation16], 1
    %2313 = vsyncpa [#allocation8], 1
    %s2314 = scalar_lea.sflag [#allocation8], 1
    %2315 = vsyncpa %s2314, 1

</llo_original>
